<compile_context>
chip_gen: v7x
topology: tpu7x:2x2x1
jax: 0.10.0
libtpu: 0.0.40
codegen_flags: <defaults>
</compile_context>

<pallas_src>
import jax
import jax.numpy as jnp
from jax.experimental import pallas as pl
from jax.experimental.pallas import tpu as pltpu

EPS = 1e-5  # BatchNorm1d eps


# ----------------------------------------- kernel -------------------------------------------

def _fnet13_2_kernel(vx_ref, ax_ref, w128_ref, w256_ref, vec_ref, out_ref):
    B = vx_ref.shape[0]

    def w(a, b):
        # static row-slice of the packed 128-lane weight blob (aligned, zero-cost view)
        return w128_ref[a:b, :]

    def v(row, a, b):
        # (1, n) bias / scale row; broadcasts over batch sublanes at the add site
        return vec_ref[row:row + 1, a:b]

    def mm(x, wgt):
        # bf16 MXU operands, f32 accumulation; everything else stays f32
        return jnp.dot(x.astype(jnp.bfloat16), wgt, preferred_element_type=jnp.float32)

    # --- stage 1: fc1(vx) and afc(ax), dense (no block-diagonal zero padding) ------------
    vo1 = jnp.maximum(mm(vx_ref[...], w(0, 512)) + v(0, 0, 128), 0.0)        # (B,128)
    axp = jnp.maximum(mm(ax_ref[...], w(512, 640)) + v(0, 128, 256), 0.0)    # (B,128)

    # --- stage 2: the four AM branch Linears as TWO dense (128,256) matmuls --------------
    # column layout of t: [hv_visual | ha_audio | ha_visual | hv_audio]
    u_v = mm(vo1, w256_ref[0:128, :])        # vo1 @ [vfc_w_v | afc_w_a]
    u_a = mm(axp, w256_ref[128:256, :])      # axp @ [afc_w_v | vfc_w_a]
    t = jnp.concatenate([u_v, u_a], axis=1) + v(1, 0, 512)
    t = jnp.maximum(t, 0.0)                  # (B,512)

    # BatchNorm1d (training-mode batch stats, biased var) for all four 128-wide segments
    # at once; two-pass variance to match the reference exactly.
    m = jnp.mean(t, axis=0, keepdims=True)
    c = t - m
    var = jnp.mean(c * c, axis=0, keepdims=True)
    t = c * jax.lax.rsqrt(var + EPS) * v(2, 0, 512) + v(3, 0, 512)

    # --- stage 3: per-AM (hv + ha), then each AM's fusion Linear (dense 128x128) ---------
    s_v = t[:, 0:128] + t[:, 256:384]        # visual AM: hv + ha
    s_a = t[:, 384:512] + t[:, 128:256]      # audio  AM: hv + ha
    att_v = jnp.maximum(mm(s_v, w(640, 768)) + v(0, 256, 384), 0.0)
    att_a = jnp.maximum(mm(s_a, w(768, 896)) + v(0, 384, 512), 0.0)

    # --- stage 4: WV(visual) + WA(audio), then top fusion + ReLU -------------------------
    z = mm(att_v, w(896, 1024)) + mm(att_a, w(1024, 1152)) + v(4, 0, 128)
    attx = jnp.maximum(mm(z, w(1152, 1280)) + v(4, 128, 256), 0.0)           # (B,128)

    # --- stage 5: shared fc2 -> ReLU -> fc3 heads on [attx; vo1; ax] stacked on batch ----
    x3 = jnp.concatenate([attx, vo1, axp], axis=0)                           # (3B,128)
    # fc2 is zero-padded to 128 output lanes; its bias lane 64 is 1.0 and the fc3 row's
    # lane 64 holds fc3_b, so the lane-reduce below yields fc2-out . fc3_w + fc3_b.
    h2 = jnp.maximum(mm(x3, w(1280, 1408)) + v(4, 256, 384), 0.0)            # (3B,128)
    heads = jnp.sum(h2 * v(4, 384, 512), axis=-1, keepdims=True)             # (3B,1), f32

    # --- single lane-dense output slab: [features | head broadcast over 128 lanes] -------
    out_ref[:, 0:128] = x3
    out_ref[:, 128:256] = jnp.broadcast_to(heads, (3 * B, 128))


def _full_spec(shape):
    # whole-array block, resident in VMEM for the single (gridless) invocation
    return pl.BlockSpec(shape, lambda: (0,) * len(shape))


def fnet13_2_forward(vx, ax, fused):
    B = vx.shape[0]
    args = (vx, ax, fused["w128"], fused["w256"], fused["vec"])
    out = pl.pallas_call(
        _fnet13_2_kernel,
        out_shape=jax.ShapeDtypeStruct((3 * B, 256), jnp.float32),
        in_specs=[_full_spec(a.shape) for a in args],
        out_specs=_full_spec((3 * B, 256)),
        compiler_params=pltpu.CompilerParams(vmem_limit_bytes=32 << 20),
    )(*args)
    attx = out[0:B, 0:128]
    vo1 = out[B:2 * B, 0:128]
    axp = out[2 * B:3 * B, 0:128]
    att_out = out[0:B, 128:129]
    vout = out[B:2 * B, 128:129]
    aout = out[2 * B:3 * B, 128:129]
    return att_out, vout, aout, attx, vo1, axp


# ----------------------------- parameters & fused-weight builder -----------------------------

def make_params(key, feature_dim=512, d=128):
    def lin(k, n_in, n_out, scale=0.05):
        kw, kb = jax.random.split(k)
        return (scale * jax.random.normal(kw, (n_in, n_out), jnp.float32),
                scale * jax.random.normal(kb, (n_out,), jnp.float32))

    def att_unit(k):
        ks = jax.random.split(k, 7)
        vfc_w, vfc_b = lin(ks[0], d, d)
        afc_w, afc_b = lin(ks[1], d, d)
        fus_w, fus_b = lin(ks[2], d, d)
        return dict(vfc_w=vfc_w, vfc_b=vfc_b, afc_w=afc_w, afc_b=afc_b,
                    fus_w=fus_w, fus_b=fus_b,
                    bn1_g=1.0 + 0.1 * jax.random.normal(ks[3], (d,), jnp.float32),
                    bn1_b=0.1 * jax.random.normal(ks[4], (d,), jnp.float32),
                    bn2_g=1.0 + 0.1 * jax.random.normal(ks[5], (d,), jnp.float32),
                    bn2_b=0.1 * jax.random.normal(ks[6], (d,), jnp.float32))

    ks = jax.random.split(key, 9)
    fc1_w, fc1_b = lin(ks[0], feature_dim, d)
    afc_w, afc_b = lin(ks[1], d, d)
    wa_w, wa_b = lin(ks[2], d, d)
    wv_w, wv_b = lin(ks[3], d, d)
    fus_w, fus_b = lin(ks[4], d, d)
    fc2_w, fc2_b = lin(ks[5], d, 64)
    fc3_w, fc3_b = lin(ks[6], 64, 1)
    return dict(fc1_w=fc1_w, fc1_b=fc1_b, afc_w=afc_w, afc_b=afc_b,
                am_v=att_unit(ks[7]), am_a=att_unit(ks[8]),
                wa_w=wa_w, wa_b=wa_b, wv_w=wv_w, wv_b=wv_b,
                fus_w=fus_w, fus_b=fus_b, fc2_w=fc2_w, fc2_b=fc2_b,
                fc3_w=fc3_w, fc3_b=fc3_b)


def build_fused_params(p, d=128):
    amv, ama = p["am_v"], p["am_a"]

    # fc2 zero-padded to 128 output lanes (columns 64:128 are exactly zero by construction;
    # the head reduce relies on that, see fc2b_pad / fc3_row below).
    fc2p = jnp.zeros((d, d), jnp.float32).at[:, 0:64].set(p["fc2_w"])

    # Packed 128-lane weight blob (bf16), dense -- no zero blocks DMA'd.
    w128 = jnp.concatenate([
        p["fc1_w"],       # rows    0: 512  fc1
        p["afc_w"],       # rows  512: 640  afc
        amv["fus_w"],     # rows  640: 768  visual-AM fusion
        ama["fus_w"],     # rows  768: 896  audio-AM fusion
        p["wv_w"],        # rows  896:1024  WV
        p["wa_w"],        # rows 1024:1152  WA
        p["fus_w"],       # rows 1152:1280  top fusion
        fc2p,             # rows 1280:1408  fc2 (padded to 128 lanes)
    ], axis=0).astype(jnp.bfloat16)                                         # (1408,128)

    # Packed 256-lane blob: the four AM branch Linears as two dense (128,256) blocks,
    # column-ordered so stage-3's s_visual / s_audio are 128-lane-aligned slices.
    w256 = jnp.concatenate([
        jnp.concatenate([amv["vfc_w"], ama["afc_w"]], axis=1),   # applied to vo1
        jnp.concatenate([amv["afc_w"], ama["vfc_w"]], axis=1),   # applied to ax
    ], axis=0).astype(jnp.bfloat16)                                         # (256,256)

    # fc2 bias padded to 128 with lane 64 = 1.0, and the fc3 "row" with lane 64 = fc3_b,
    # so head = sum(relu(x@fc2p + b) * fc3_row) == fc2-out . fc3_w + fc3_b.
    fc2b_pad = jnp.zeros((d,), jnp.float32).at[0:64].set(p["fc2_b"]).at[64].set(1.0)
    fc3_row = jnp.zeros((d,), jnp.float32).at[0:64].set(p["fc3_w"][:, 0]).at[64].set(p["fc3_b"][0])

    # One (5,512) f32 table with every small vector -> a single DMA.
    vec = jnp.stack([
        jnp.concatenate([p["fc1_b"], p["afc_b"], amv["fus_b"], ama["fus_b"]]),
        jnp.concatenate([amv["vfc_b"], ama["afc_b"], amv["afc_b"], ama["vfc_b"]]),   # bias of t
        jnp.concatenate([amv["bn1_g"], ama["bn2_g"], amv["bn2_g"], ama["bn1_g"]]),   # gamma of t
        jnp.concatenate([amv["bn1_b"], ama["bn2_b"], amv["bn2_b"], ama["bn1_b"]]),   # beta of t
        jnp.concatenate([p["wv_b"] + p["wa_b"], p["fus_b"], fc2b_pad, fc3_row]),
    ]).astype(jnp.float32)                                                  # (5,512)

    return dict(w128=w128, w256=w256, vec=vec)


# ----------------------------------- pure-JAX reference --------------------------------------
# Uses the ORIGINAL per-layer parameters (independent of the fused packing).  Matmuls use
# bf16 operands with f32 accumulation to mirror the kernel's MXU precision; the tiny fc3
# head is f32 in both.

def _reference(vx, ax, p):
    def mm(x, w):
        return jnp.dot(x.astype(jnp.bfloat16), w.astype(jnp.bfloat16),
                       preferred_element_type=jnp.float32)

    def bn(h, g, b):
        m = jnp.mean(h, axis=0, keepdims=True)
        c = h - m
        v = jnp.mean(c * c, axis=0, keepdims=True)
        return c * jax.lax.rsqrt(v + EPS) * g + b

    def am(x, y, q):
        hv = bn(jnp.maximum(mm(x, q["vfc_w"]) + q["vfc_b"], 0.0), q["bn1_g"], q["bn1_b"])
        ha = bn(jnp.maximum(mm(y, q["afc_w"]) + q["afc_b"], 0.0), q["bn2_g"], q["bn2_b"])
        return jnp.maximum(mm(hv + ha, q["fus_w"]) + q["fus_b"], 0.0)

    vo1 = jnp.maximum(mm(vx, p["fc1_w"]) + p["fc1_b"], 0.0)     # dropout == identity (eval)
    axp = jnp.maximum(mm(ax, p["afc_w"]) + p["afc_b"], 0.0)
    v_att = am(vo1, axp, p["am_v"])
    a_att = am(axp, vo1, p["am_a"])
    z = mm(a_att, p["wa_w"]) + p["wa_b"] + mm(v_att, p["wv_w"]) + p["wv_b"]
    attx = jnp.maximum(mm(z, p["fus_w"]) + p["fus_b"], 0.0)

    def head(t):
        h = jnp.maximum(mm(t, p["fc2_w"]) + p["fc2_b"], 0.0)
        return h @ p["fc3_w"] + p["fc3_b"]                      # f32, matches kernel reduce

    return head(attx), head(vo1), head(axp), attx, vo1, axp


if __name__ == "__main__":
    B, FEATURE_DIM, D = 8, 512, 128

    key = jax.random.PRNGKey(0)
    k_vx, k_ax, k_p = jax.random.split(key, 3)
    vx = jax.random.normal(k_vx, (B, FEATURE_DIM), jnp.float32)
    ax = jax.random.normal(k_ax, (B, D), jnp.float32)
    params = make_params(k_p, FEATURE_DIM, D)
    fused = build_fused_params(params, D)

    outs = fnet13_2_forward(vx, ax, fused)
    outs = jax.block_until_ready(outs)
    refs = _reference(vx, ax, params)

    names = ("att_out", "vout", "aout", "attx", "vo1", "ax")
    for name, o, r in zip(names, outs, refs):
        assert o.shape == r.shape, f"{name}: shape {o.shape} vs {r.shape}"
        assert jnp.allclose(o, r, atol=2e-3, rtol=2e-3), f"{name}: mismatch vs reference"

    print("KERNEL_OK")
</pallas_src>

<mosaic_0001>
module attributes {stable_mosaic.version = 11 : i64} {
  func.func @_fnet13_2_kernel(%arg0: memref<8x512xf32, #tpu.memory_space<vmem>>, %arg1: memref<8x128xf32, #tpu.memory_space<vmem>>, %arg2: memref<1408x128xbf16, #tpu.memory_space<vmem>>, %arg3: memref<256x256xbf16, #tpu.memory_space<vmem>>, %arg4: memref<5x512xf32, #tpu.memory_space<vmem>>, %arg5: memref<24x256xf32, #tpu.memory_space<vmem>>) attributes {dimension_semantics = [], scalar_prefetch = 0 : i64, scratch_operands = 0 : i64, tpu.core_type = #tpu.core_type<tc>} {
    %c0 = arith.constant 0 : index
    %c0_0 = arith.constant 0 : index
    %0 = vector.load %arg0[%c0, %c0_0] : memref<8x512xf32, #tpu.memory_space<vmem>>, vector<8x512xf32>
    %c0_1 = arith.constant 0 : index
    %c0_2 = arith.constant 0 : index
    %1 = vector.load %arg2[%c0_1, %c0_2] : memref<1408x128xbf16, #tpu.memory_space<vmem>>, vector<512x128xbf16>
    %2 = arith.truncf %0 : vector<8x512xf32> to vector<8x512xbf16>
    %cst = arith.constant dense<0.000000e+00> : vector<8x128xf32>
    %3 = tpu.matmul %2, %1, %cst {dimension_numbers = #tpu.dot_dimension_numbers<[1], [0], [0], [1], [0, 0, 1, 1], [], []>} : vector<8x512xbf16>, vector<512x128xbf16>, vector<8x128xf32> -> vector<8x128xf32>
    %c0_3 = arith.constant 0 : index
    %c0_4 = arith.constant 0 : index
    %4 = vector.load %arg4[%c0_3, %c0_4] : memref<5x512xf32, #tpu.memory_space<vmem>>, vector<1x128xf32>
    %5 = vector.broadcast %4 : vector<1x128xf32> to vector<8x128xf32>
    %6 = arith.addf %3, %5 : vector<8x128xf32>
    %cst_5 = arith.constant 0.000000e+00 : f32
    %7 = vector.broadcast %cst_5 : f32 to vector<8x128xf32>
    %8 = arith.maximumf %6, %7 : vector<8x128xf32>
    %c0_6 = arith.constant 0 : index
    %c0_7 = arith.constant 0 : index
    %9 = vector.load %arg1[%c0_6, %c0_7] : memref<8x128xf32, #tpu.memory_space<vmem>>, vector<8x128xf32>
    %c512 = arith.constant 512 : index
    %c0_8 = arith.constant 0 : index
    %10 = vector.load %arg2[%c512, %c0_8] : memref<1408x128xbf16, #tpu.memory_space<vmem>>, vector<128x128xbf16>
    %11 = arith.truncf %9 : vector<8x128xf32> to vector<8x128xbf16>
    %cst_9 = arith.constant dense<0.000000e+00> : vector<8x128xf32>
    %12 = tpu.matmul %11, %10, %cst_9 {dimension_numbers = #tpu.dot_dimension_numbers<[1], [0], [0], [1], [0, 0, 1, 1], [], []>} : vector<8x128xbf16>, vector<128x128xbf16>, vector<8x128xf32> -> vector<8x128xf32>
    %c0_10 = arith.constant 0 : index
    %c128 = arith.constant 128 : index
    %13 = vector.load %arg4[%c0_10, %c128] : memref<5x512xf32, #tpu.memory_space<vmem>>, vector<1x128xf32>
    %14 = vector.broadcast %13 : vector<1x128xf32> to vector<8x128xf32>
    %15 = arith.addf %12, %14 : vector<8x128xf32>
    %cst_11 = arith.constant 0.000000e+00 : f32
    %16 = vector.broadcast %cst_11 : f32 to vector<8x128xf32>
    %17 = arith.maximumf %15, %16 : vector<8x128xf32>
    %c0_12 = arith.constant 0 : index
    %c0_13 = arith.constant 0 : index
    %18 = vector.load %arg3[%c0_12, %c0_13] : memref<256x256xbf16, #tpu.memory_space<vmem>>, vector<128x256xbf16>
    %19 = arith.truncf %8 : vector<8x128xf32> to vector<8x128xbf16>
    %cst_14 = arith.constant dense<0.000000e+00> : vector<8x256xf32>
    %20 = tpu.matmul %19, %18, %cst_14 {dimension_numbers = #tpu.dot_dimension_numbers<[1], [0], [0], [1], [0, 0, 1, 1], [], []>} : vector<8x128xbf16>, vector<128x256xbf16>, vector<8x256xf32> -> vector<8x256xf32>
    %c128_15 = arith.constant 128 : index
    %c0_16 = arith.constant 0 : index
    %21 = vector.load %arg3[%c128_15, %c0_16] : memref<256x256xbf16, #tpu.memory_space<vmem>>, vector<128x256xbf16>
    %22 = arith.truncf %17 : vector<8x128xf32> to vector<8x128xbf16>
    %cst_17 = arith.constant dense<0.000000e+00> : vector<8x256xf32>
    %23 = tpu.matmul %22, %21, %cst_17 {dimension_numbers = #tpu.dot_dimension_numbers<[1], [0], [0], [1], [0, 0, 1, 1], [], []>} : vector<8x128xbf16>, vector<128x256xbf16>, vector<8x256xf32> -> vector<8x256xf32>
    %24 = tpu.concatenate %20, %23 in 1 : vector<8x256xf32>, vector<8x256xf32> -> vector<8x512xf32>
    %c1 = arith.constant 1 : index
    %c0_18 = arith.constant 0 : index
    %25 = vector.load %arg4[%c1, %c0_18] : memref<5x512xf32, #tpu.memory_space<vmem>>, vector<1x512xf32>
    %26 = vector.broadcast %25 : vector<1x512xf32> to vector<8x512xf32>
    %27 = arith.addf %24, %26 : vector<8x512xf32>
    %cst_19 = arith.constant 0.000000e+00 : f32
    %28 = vector.broadcast %cst_19 : f32 to vector<8x512xf32>
    %29 = arith.maximumf %27, %28 : vector<8x512xf32>
    %cst_20 = arith.constant dense<0.000000e+00> : vector<512xf32>
    %30 = vector.multi_reduction <add>, %29, %cst_20 [0] : vector<8x512xf32> to vector<512xf32>
    %31 = vector.shape_cast %30 : vector<512xf32> to vector<1x512xf32>
    %cst_21 = arith.constant 8.000000e+00 : f32
    %32 = vector.broadcast %cst_21 : f32 to vector<1x512xf32>
    %33 = arith.divf %31, %32 : vector<1x512xf32>
    %34 = vector.broadcast %33 : vector<1x512xf32> to vector<8x512xf32>
    %35 = arith.subf %29, %34 : vector<8x512xf32>
    %36 = arith.mulf %35, %35 : vector<8x512xf32>
    %cst_22 = arith.constant dense<0.000000e+00> : vector<512xf32>
    %37 = vector.multi_reduction <add>, %36, %cst_22 [0] : vector<8x512xf32> to vector<512xf32>
    %38 = vector.shape_cast %37 : vector<512xf32> to vector<1x512xf32>
    %cst_23 = arith.constant 8.000000e+00 : f32
    %39 = vector.broadcast %cst_23 : f32 to vector<1x512xf32>
    %40 = arith.divf %38, %39 : vector<1x512xf32>
    %cst_24 = arith.constant 9.99999974E-6 : f32
    %41 = vector.broadcast %cst_24 : f32 to vector<1x512xf32>
    %42 = arith.addf %40, %41 : vector<1x512xf32>
    %43 = math.rsqrt %42 : vector<1x512xf32>
    %44 = vector.broadcast %43 : vector<1x512xf32> to vector<8x512xf32>
    %45 = arith.mulf %35, %44 : vector<8x512xf32>
    %c2 = arith.constant 2 : index
    %c0_25 = arith.constant 0 : index
    %46 = vector.load %arg4[%c2, %c0_25] : memref<5x512xf32, #tpu.memory_space<vmem>>, vector<1x512xf32>
    %47 = vector.broadcast %46 : vector<1x512xf32> to vector<8x512xf32>
    %48 = arith.mulf %45, %47 : vector<8x512xf32>
    %c3 = arith.constant 3 : index
    %c0_26 = arith.constant 0 : index
    %49 = vector.load %arg4[%c3, %c0_26] : memref<5x512xf32, #tpu.memory_space<vmem>>, vector<1x512xf32>
    %50 = vector.broadcast %49 : vector<1x512xf32> to vector<8x512xf32>
    %51 = arith.addf %48, %50 : vector<8x512xf32>
    %52 = vector.extract_strided_slice %51 {offsets = [0, 0], sizes = [8, 128], strides = [1, 1]} : vector<8x512xf32> to vector<8x128xf32>
    %53 = vector.extract_strided_slice %51 {offsets = [0, 256], sizes = [8, 128], strides = [1, 1]} : vector<8x512xf32> to vector<8x128xf32>
    %54 = arith.addf %52, %53 : vector<8x128xf32>
    %55 = vector.extract_strided_slice %51 {offsets = [0, 384], sizes = [8, 128], strides = [1, 1]} : vector<8x512xf32> to vector<8x128xf32>
    %56 = vector.extract_strided_slice %51 {offsets = [0, 128], sizes = [8, 128], strides = [1, 1]} : vector<8x512xf32> to vector<8x128xf32>
    %57 = arith.addf %55, %56 : vector<8x128xf32>
    %c640 = arith.constant 640 : index
    %c0_27 = arith.constant 0 : index
    %58 = vector.load %arg2[%c640, %c0_27] : memref<1408x128xbf16, #tpu.memory_space<vmem>>, vector<128x128xbf16>
    %59 = arith.truncf %54 : vector<8x128xf32> to vector<8x128xbf16>
    %cst_28 = arith.constant dense<0.000000e+00> : vector<8x128xf32>
    %60 = tpu.matmul %59, %58, %cst_28 {dimension_numbers = #tpu.dot_dimension_numbers<[1], [0], [0], [1], [0, 0, 1, 1], [], []>} : vector<8x128xbf16>, vector<128x128xbf16>, vector<8x128xf32> -> vector<8x128xf32>
    %c0_29 = arith.constant 0 : index
    %c256 = arith.constant 256 : index
    %61 = vector.load %arg4[%c0_29, %c256] : memref<5x512xf32, #tpu.memory_space<vmem>>, vector<1x128xf32>
    %62 = vector.broadcast %61 : vector<1x128xf32> to vector<8x128xf32>
    %63 = arith.addf %60, %62 : vector<8x128xf32>
    %cst_30 = arith.constant 0.000000e+00 : f32
    %64 = vector.broadcast %cst_30 : f32 to vector<8x128xf32>
    %65 = arith.maximumf %63, %64 : vector<8x128xf32>
    %c768 = arith.constant 768 : index
    %c0_31 = arith.constant 0 : index
    %66 = vector.load %arg2[%c768, %c0_31] : memref<1408x128xbf16, #tpu.memory_space<vmem>>, vector<128x128xbf16>
    %67 = arith.truncf %57 : vector<8x128xf32> to vector<8x128xbf16>
    %cst_32 = arith.constant dense<0.000000e+00> : vector<8x128xf32>
    %68 = tpu.matmul %67, %66, %cst_32 {dimension_numbers = #tpu.dot_dimension_numbers<[1], [0], [0], [1], [0, 0, 1, 1], [], []>} : vector<8x128xbf16>, vector<128x128xbf16>, vector<8x128xf32> -> vector<8x128xf32>
    %c0_33 = arith.constant 0 : index
    %c384 = arith.constant 384 : index
    %69 = vector.load %arg4[%c0_33, %c384] : memref<5x512xf32, #tpu.memory_space<vmem>>, vector<1x128xf32>
    %70 = vector.broadcast %69 : vector<1x128xf32> to vector<8x128xf32>
    %71 = arith.addf %68, %70 : vector<8x128xf32>
    %cst_34 = arith.constant 0.000000e+00 : f32
    %72 = vector.broadcast %cst_34 : f32 to vector<8x128xf32>
    %73 = arith.maximumf %71, %72 : vector<8x128xf32>
    %c896 = arith.constant 896 : index
    %c0_35 = arith.constant 0 : index
    %74 = vector.load %arg2[%c896, %c0_35] : memref<1408x128xbf16, #tpu.memory_space<vmem>>, vector<128x128xbf16>
    %75 = arith.truncf %65 : vector<8x128xf32> to vector<8x128xbf16>
    %cst_36 = arith.constant dense<0.000000e+00> : vector<8x128xf32>
    %76 = tpu.matmul %75, %74, %cst_36 {dimension_numbers = #tpu.dot_dimension_numbers<[1], [0], [0], [1], [0, 0, 1, 1], [], []>} : vector<8x128xbf16>, vector<128x128xbf16>, vector<8x128xf32> -> vector<8x128xf32>
    %c1024 = arith.constant 1024 : index
    %c0_37 = arith.constant 0 : index
    %77 = vector.load %arg2[%c1024, %c0_37] : memref<1408x128xbf16, #tpu.memory_space<vmem>>, vector<128x128xbf16>
    %78 = arith.truncf %73 : vector<8x128xf32> to vector<8x128xbf16>
    %cst_38 = arith.constant dense<0.000000e+00> : vector<8x128xf32>
    %79 = tpu.matmul %78, %77, %cst_38 {dimension_numbers = #tpu.dot_dimension_numbers<[1], [0], [0], [1], [0, 0, 1, 1], [], []>} : vector<8x128xbf16>, vector<128x128xbf16>, vector<8x128xf32> -> vector<8x128xf32>
    %80 = arith.addf %76, %79 : vector<8x128xf32>
    %c4 = arith.constant 4 : index
    %c0_39 = arith.constant 0 : index
    %81 = vector.load %arg4[%c4, %c0_39] : memref<5x512xf32, #tpu.memory_space<vmem>>, vector<1x128xf32>
    %82 = vector.broadcast %81 : vector<1x128xf32> to vector<8x128xf32>
    %83 = arith.addf %80, %82 : vector<8x128xf32>
    %c1152 = arith.constant 1152 : index
    %c0_40 = arith.constant 0 : index
    %84 = vector.load %arg2[%c1152, %c0_40] : memref<1408x128xbf16, #tpu.memory_space<vmem>>, vector<128x128xbf16>
    %85 = arith.truncf %83 : vector<8x128xf32> to vector<8x128xbf16>
    %cst_41 = arith.constant dense<0.000000e+00> : vector<8x128xf32>
    %86 = tpu.matmul %85, %84, %cst_41 {dimension_numbers = #tpu.dot_dimension_numbers<[1], [0], [0], [1], [0, 0, 1, 1], [], []>} : vector<8x128xbf16>, vector<128x128xbf16>, vector<8x128xf32> -> vector<8x128xf32>
    %c4_42 = arith.constant 4 : index
    %c128_43 = arith.constant 128 : index
    %87 = vector.load %arg4[%c4_42, %c128_43] : memref<5x512xf32, #tpu.memory_space<vmem>>, vector<1x128xf32>
    %88 = vector.broadcast %87 : vector<1x128xf32> to vector<8x128xf32>
    %89 = arith.addf %86, %88 : vector<8x128xf32>
    %cst_44 = arith.constant 0.000000e+00 : f32
    %90 = vector.broadcast %cst_44 : f32 to vector<8x128xf32>
    %91 = arith.maximumf %89, %90 : vector<8x128xf32>
    %92 = tpu.concatenate %91, %8, %17 in 0 : vector<8x128xf32>, vector<8x128xf32>, vector<8x128xf32> -> vector<24x128xf32>
    %c1280 = arith.constant 1280 : index
    %c0_45 = arith.constant 0 : index
    %93 = vector.load %arg2[%c1280, %c0_45] : memref<1408x128xbf16, #tpu.memory_space<vmem>>, vector<128x128xbf16>
    %94 = arith.truncf %92 : vector<24x128xf32> to vector<24x128xbf16>
    %cst_46 = arith.constant dense<0.000000e+00> : vector<24x128xf32>
    %95 = tpu.matmul %94, %93, %cst_46 {dimension_numbers = #tpu.dot_dimension_numbers<[1], [0], [0], [1], [0, 0, 1, 1], [], []>} : vector<24x128xbf16>, vector<128x128xbf16>, vector<24x128xf32> -> vector<24x128xf32>
    %c4_47 = arith.constant 4 : index
    %c256_48 = arith.constant 256 : index
    %96 = vector.load %arg4[%c4_47, %c256_48] : memref<5x512xf32, #tpu.memory_space<vmem>>, vector<1x128xf32>
    %97 = vector.broadcast %96 : vector<1x128xf32> to vector<24x128xf32>
    %98 = arith.addf %95, %97 : vector<24x128xf32>
    %cst_49 = arith.constant 0.000000e+00 : f32
    %99 = vector.broadcast %cst_49 : f32 to vector<24x128xf32>
    %100 = arith.maximumf %98, %99 : vector<24x128xf32>
    %c4_50 = arith.constant 4 : index
    %c384_51 = arith.constant 384 : index
    %101 = vector.load %arg4[%c4_50, %c384_51] : memref<5x512xf32, #tpu.memory_space<vmem>>, vector<1x128xf32>
    %102 = vector.broadcast %101 : vector<1x128xf32> to vector<24x128xf32>
    %103 = arith.mulf %100, %102 : vector<24x128xf32>
    %cst_52 = arith.constant dense<0.000000e+00> : vector<24xf32>
    %104 = vector.multi_reduction <add>, %103, %cst_52 [1] : vector<24x128xf32> to vector<24xf32>
    %105 = vector.shape_cast %104 : vector<24xf32> to vector<24x1xf32>
    %c0_53 = arith.constant 0 : index
    %c0_54 = arith.constant 0 : index
    %106 = vector.load %arg5[%c0_53, %c0_54] : memref<24x256xf32, #tpu.memory_space<vmem>>, vector<24x128xf32>
    tpu.vector_store %arg5[%c0_53, %c0_54], %92 {strides = array<i32>} : memref<24x256xf32, #tpu.memory_space<vmem>>, vector<24x128xf32>,
    %107 = vector.shape_cast %105 : vector<24x1xf32> to vector<24x1xf32>
    %108 = vector.broadcast %107 : vector<24x1xf32> to vector<24x128xf32>
    %c0_55 = arith.constant 0 : index
    %c128_56 = arith.constant 128 : index
    %109 = vector.load %arg5[%c0_55, %c128_56] : memref<24x256xf32, #tpu.memory_space<vmem>>, vector<24x128xf32>
    tpu.vector_store %arg5[%c0_55, %c128_56], %108 {strides = array<i32>} : memref<24x256xf32, #tpu.memory_space<vmem>>, vector<24x128xf32>,
    return
  }
}

</mosaic_0001>

<llo_original>
// kernel: tpu_custom_call.1
$region0: #{tpu_custom_call.1}
  #allocation0 [shape = 'u32[]', space=smem, size = 0x4, offset = 0x4, fixed_abs, tag = 'smem constant byte address 0x4 - core index']
  #allocation1 [shape = 'u32[144,128]{1,0:T(1,128)}', space=vmem, size = 0x12000, scoped, tag = 'internal scratch']
  %s0 = inlined_call_operand.hbm [shape: f32[8,512], index: 0, kind: input, shape index: {}]
  %s1 = inlined_call_operand.hbm [shape: f32[8,128], index: 1, kind: input, shape index: {}]
  %s2 = inlined_call_operand.hbm [shape: bf16[1408,128], index: 2, kind: input, shape index: {}]
  %s3 = inlined_call_operand.hbm [shape: bf16[256,256], index: 3, kind: input, shape index: {}]
  %s4 = inlined_call_operand.hbm [shape: f32[5,512], index: 4, kind: input, shape index: {}]
  %s5 = inlined_call_operand.hbm [shape: f32[24,256], index: 5, kind: output, shape index: {}]
  %s6 = sld [smem:[#allocation0]]
  $region50: #{tpu_custom_call.1} parent=0
    _
  %s8 = ssub.s32 1, %s6
  %s9 = scalar_select 0, %s8, %s6
  $region1: #{tpu_custom_call.1} parent=0
    #allocation2 [shape = 'u8[16384]{0}', space=vmem, size = 0x4000, scoped, tag = 'input window, operand 0, single buffered']
    #allocation3 [shape = 's32[1]{0}', space=sflag, size = 0x4, scoped, tag = 'scoped memory for tpu_custom_call.1']
    #allocation4 [shape = 's32[1]{0}', space=sflag, size = 0x4, scoped, tag = 'scoped memory for tpu_custom_call.1']
    #allocation5 [shape = 'u8[4096]{0}', space=vmem, size = 0x1000, scoped, tag = 'input window, operand 1, single buffered']
    #allocation6 [shape = 's32[1]{0}', space=sflag, size = 0x4, scoped, tag = 'scoped memory for tpu_custom_call.1']
    #allocation7 [shape = 'u8[360448]{0}', space=vmem, size = 0x58000, scoped, tag = 'input window, operand 2, single buffered']
    #allocation8 [shape = 'u8[131072]{0}', space=vmem, size = 0x20000, scoped, tag = 'input window, operand 3, single buffered']
    #allocation9 [shape = 's32[1]{0}', space=sflag, size = 0x4, scoped, tag = 'scoped memory for tpu_custom_call.1']
    #allocation10 [shape = 'u8[16384]{0}', space=vmem, size = 0x4000, scoped, tag = 'input window, operand 4, single buffered']
    #allocation11 [shape = 'u8[24576]{0}', space=vmem, size = 0x6000, scoped, tag = 'output window, operand 0, single buffered']
    %10 = vsyncpa [#allocation3], 0
    %11 = vsyncpa [#allocation6], 0
    %12 = vsyncpa [#allocation9], 0
    %13 = vsyncpa [#allocation4], 0
    // Predicated region
    $region2: #{tpu_custom_call.1} parent=1 // pred_check
      _
    $region3: #{tpu_custom_call.1} parent=1 // pred_check_branch
      %15 = sbr.rel (0) target = $region5
    $region4: #{tpu_custom_call.1} parent=1 // pred_region
      %s17 = ssub.s32 512, 512
      %18 = vsyncadd [#allocation3], %s17
      %s20 = sshll.u32 [#allocation2], 4
      %s21 = int_to_ptr.vmem [resolvable:$true] %s20
      %23 = dma.hbm_to_vmem [thread:$0]  %s0, 512, %s21, [#allocation3]
    $region5: #{tpu_custom_call.1} parent=1 // pred_fallthru
      _
    // Predicated region
    $region6: #{tpu_custom_call.1} parent=1 // pred_check
      _
    $region7: #{tpu_custom_call.1} parent=1 // pred_check_branch
      %25 = sbr.rel (0) target = $region9
    $region8: #{tpu_custom_call.1} parent=1 // pred_region
      %s27 = ssub.s32 128, 128
      %28 = vsyncadd [#allocation6], %s27
      %s30 = sshll.u32 [#allocation5], 4
      %s31 = int_to_ptr.vmem [resolvable:$true] %s30
      %33 = dma.hbm_to_vmem [thread:$0]  %s1, 128, %s31, [#allocation6]
    $region9: #{tpu_custom_call.1} parent=1 // pred_fallthru
      _
    // Predicated region
    $region10: #{tpu_custom_call.1} parent=1 // pred_check
      _
    $region11: #{tpu_custom_call.1} parent=1 // pred_check_branch
      %35 = sbr.rel (0) target = $region13
    $region12: #{tpu_custom_call.1} parent=1 // pred_region
      %s37 = ssub.s32 11264, 11264
      %38 = vsyncadd [#allocation6], %s37
      %s39 = sshll.u32 [#allocation7], 4
      %s40 = int_to_ptr.vmem [resolvable:$true] %s39
      %45 = dma.hbm_to_vmem [thread:$0]  %s2, 11264, %s40, [#allocation6], 64, 64, 4
    $region13: #{tpu_custom_call.1} parent=1 // pred_fallthru
      _
    // Predicated region
    $region14: #{tpu_custom_call.1} parent=1 // pred_check
      _
    $region15: #{tpu_custom_call.1} parent=1 // pred_check_branch
      %47 = sbr.rel (0) target = $region17
    $region16: #{tpu_custom_call.1} parent=1 // pred_region
      %s49 = ssub.s32 4096, 4096
      %50 = vsyncadd [#allocation9], %s49
      %s51 = sshll.u32 [#allocation8], 4
      %s52 = int_to_ptr.vmem [resolvable:$true] %s51
      %57 = dma.hbm_to_vmem [thread:$0]  %s3, 4096, %s52, [#allocation9], 128, 128, 8
    $region17: #{tpu_custom_call.1} parent=1 // pred_fallthru
      _
    // Predicated region
    $region18: #{tpu_custom_call.1} parent=1 // pred_check
      _
    $region19: #{tpu_custom_call.1} parent=1 // pred_check_branch
      %59 = sbr.rel (0) target = $region21
    $region20: #{tpu_custom_call.1} parent=1 // pred_region
      %s61 = ssub.s32 512, 512
      %62 = vsyncadd [#allocation9], %s61
      %s64 = sshll.u32 [#allocation10], 4
      %s65 = int_to_ptr.vmem [resolvable:$true] %s64
      %67 = dma.hbm_to_vmem [thread:$0]  %s4, 512, %s65, [#allocation9]
    $region21: #{tpu_custom_call.1} parent=1 // pred_fallthru
      _
    // Predicated region
    $region22: #{tpu_custom_call.1} parent=1 // pred_check
      _
    $region23: #{tpu_custom_call.1} parent=1 // pred_check_branch
      %69 = sbr.rel (0) target = $region25
    $region24: #{tpu_custom_call.1} parent=1 // pred_region
      %70 = dma.done [#allocation3], 512
    $region25: #{tpu_custom_call.1} parent=1 // pred_fallthru
      _
    // Predicated region
    $region26: #{tpu_custom_call.1} parent=1 // pred_check
      _
    $region27: #{tpu_custom_call.1} parent=1 // pred_check_branch
      %72 = sbr.rel (0) target = $region29
    $region28: #{tpu_custom_call.1} parent=1 // pred_region
      %73 = dma.done [#allocation6], 128
    $region29: #{tpu_custom_call.1} parent=1 // pred_fallthru
      _
    // Predicated region
    $region30: #{tpu_custom_call.1} parent=1 // pred_check
      _
    $region31: #{tpu_custom_call.1} parent=1 // pred_check_branch
      %75 = sbr.rel (0) target = $region33
    $region32: #{tpu_custom_call.1} parent=1 // pred_region
      %76 = dma.done [#allocation6], 11264
    $region33: #{tpu_custom_call.1} parent=1 // pred_fallthru
      _
    // Predicated region
    $region34: #{tpu_custom_call.1} parent=1 // pred_check
      _
    $region35: #{tpu_custom_call.1} parent=1 // pred_check_branch
      %78 = sbr.rel (0) target = $region37
    $region36: #{tpu_custom_call.1} parent=1 // pred_region
      %79 = dma.done [#allocation9], 4096
    $region37: #{tpu_custom_call.1} parent=1 // pred_fallthru
      _
    // Predicated region
    $region38: #{tpu_custom_call.1} parent=1 // pred_check
      _
    $region39: #{tpu_custom_call.1} parent=1 // pred_check_branch
      %81 = sbr.rel (0) target = $region41
    $region40: #{tpu_custom_call.1} parent=1 // pred_region
      %82 = dma.done [#allocation9], 512
    $region41: #{tpu_custom_call.1} parent=1 // pred_fallthru
      _
    %v84 = vld [vmem:[#allocation2] sm:$0xff]
    %v85 = vld [vmem:[#allocation2 + $0x8] sm:$0xff]
    %v86 = vld [vmem:[#allocation2 + $0x10] sm:$0xff]
    %v87 = vld [vmem:[#allocation2 + $0x18] sm:$0xff]
    %v88 = vld [vmem:[#allocation7] sm:$0xf]
    %v89 = vld [vmem:[#allocation7 + $0x4] sm:$0xf]
    %v90 = vld [vmem:[#allocation7 + $0x8] sm:$0xf]
    %v91 = vld [vmem:[#allocation7 + $0xc] sm:$0xf]
    %v92 = vld [vmem:[#allocation7 + $0x10] sm:$0xf]
    %v93 = vld [vmem:[#allocation7 + $0x14] sm:$0xf]
    %v94 = vld [vmem:[#allocation7 + $0x18] sm:$0xf]
    %v95 = vld [vmem:[#allocation7 + $0x1c] sm:$0xf]
    %v96 = vld [vmem:[#allocation7 + $0x20] sm:$0xf]
    %v97 = vld [vmem:[#allocation7 + $0x24] sm:$0xf]
    %v98 = vld [vmem:[#allocation7 + $0x28] sm:$0xf]
    %v99 = vld [vmem:[#allocation7 + $0x2c] sm:$0xf]
    %v100 = vld [vmem:[#allocation7 + $0x30] sm:$0xf]
    %v101 = vld [vmem:[#allocation7 + $0x34] sm:$0xf]
    %v102 = vld [vmem:[#allocation7 + $0x38] sm:$0xf]
    %v103 = vld [vmem:[#allocation7 + $0x3c] sm:$0xf]
    %v104 = vld [vmem:[#allocation7 + $0x40] sm:$0xf]
    %v105 = vld [vmem:[#allocation7 + $0x44] sm:$0xf]
    %v106 = vld [vmem:[#allocation7 + $0x48] sm:$0xf]
    %v107 = vld [vmem:[#allocation7 + $0x4c] sm:$0xf]
    %v108 = vld [vmem:[#allocation7 + $0x50] sm:$0xf]
    %v109 = vld [vmem:[#allocation7 + $0x54] sm:$0xf]
    %v110 = vld [vmem:[#allocation7 + $0x58] sm:$0xf]
    %v111 = vld [vmem:[#allocation7 + $0x5c] sm:$0xf]
    %v112 = vld [vmem:[#allocation7 + $0x60] sm:$0xf]
    %v113 = vld [vmem:[#allocation7 + $0x64] sm:$0xf]
    %v114 = vld [vmem:[#allocation7 + $0x68] sm:$0xf]
    %v115 = vld [vmem:[#allocation7 + $0x6c] sm:$0xf]
    %v116 = vld [vmem:[#allocation7 + $0x70] sm:$0xf]
    %v117 = vld [vmem:[#allocation7 + $0x74] sm:$0xf]
    %v118 = vld [vmem:[#allocation7 + $0x78] sm:$0xf]
    %v119 = vld [vmem:[#allocation7 + $0x7c] sm:$0xf]
    %v120 = vld [vmem:[#allocation7 + $0x80] sm:$0xf]
    %v121 = vld [vmem:[#allocation7 + $0x84] sm:$0xf]
    %v122 = vld [vmem:[#allocation7 + $0x88] sm:$0xf]
    %v123 = vld [vmem:[#allocation7 + $0x8c] sm:$0xf]
    %v124 = vld [vmem:[#allocation7 + $0x90] sm:$0xf]
    %v125 = vld [vmem:[#allocation7 + $0x94] sm:$0xf]
    %v126 = vld [vmem:[#allocation7 + $0x98] sm:$0xf]
    %v127 = vld [vmem:[#allocation7 + $0x9c] sm:$0xf]
    %v128 = vld [vmem:[#allocation7 + $0xa0] sm:$0xf]
    %v129 = vld [vmem:[#allocation7 + $0xa4] sm:$0xf]
    %v130 = vld [vmem:[#allocation7 + $0xa8] sm:$0xf]
    %v131 = vld [vmem:[#allocation7 + $0xac] sm:$0xf]
    %v132 = vld [vmem:[#allocation7 + $0xb0] sm:$0xf]
    %v133 = vld [vmem:[#allocation7 + $0xb4] sm:$0xf]
    %v134 = vld [vmem:[#allocation7 + $0xb8] sm:$0xf]
    %v135 = vld [vmem:[#allocation7 + $0xbc] sm:$0xf]
    %v136 = vld [vmem:[#allocation7 + $0xc0] sm:$0xf]
    %v137 = vld [vmem:[#allocation7 + $0xc4] sm:$0xf]
    %v138 = vld [vmem:[#allocation7 + $0xc8] sm:$0xf]
    %v139 = vld [vmem:[#allocation7 + $0xcc] sm:$0xf]
    %v140 = vld [vmem:[#allocation7 + $0xd0] sm:$0xf]
    %v141 = vld [vmem:[#allocation7 + $0xd4] sm:$0xf]
    %v142 = vld [vmem:[#allocation7 + $0xd8] sm:$0xf]
    %v143 = vld [vmem:[#allocation7 + $0xdc] sm:$0xf]
    %v144 = vld [vmem:[#allocation7 + $0xe0] sm:$0xf]
    %v145 = vld [vmem:[#allocation7 + $0xe4] sm:$0xf]
    %v146 = vld [vmem:[#allocation7 + $0xe8] sm:$0xf]
    %v147 = vld [vmem:[#allocation7 + $0xec] sm:$0xf]
    %v148 = vld [vmem:[#allocation7 + $0xf0] sm:$0xf]
    %v149 = vld [vmem:[#allocation7 + $0xf4] sm:$0xf]
    %v150 = vld [vmem:[#allocation7 + $0xf8] sm:$0xf]
    %v151 = vld [vmem:[#allocation7 + $0xfc] sm:$0xf]
    %v152 = vpack.c.bf16 %v84, %v84
    %v153 = vpack.c.bf16 %v85, %v85
    %v154 = vpack.c.bf16 %v86, %v86
    %v155 = vpack.c.bf16 %v87, %v87
    %v156 = vld [vmem:[#allocation10] ss:$0 sm:$0xff]
    %v221 = vunpack.c.l.b16 %v88
    %v222 = vunpack.c.l.b16 %v89
    %v223 = vunpack.c.l.b16 %v90
    %v224 = vunpack.c.l.b16 %v91
    %v225 = vunpack.c.l.b16 %v92
    %v226 = vunpack.c.l.b16 %v93
    %v227 = vunpack.c.l.b16 %v94
    %v228 = vunpack.c.l.b16 %v95
    %v229 = vunpack.c.l.b16 %v96
    %v230 = vunpack.c.l.b16 %v97
    %v231 = vunpack.c.l.b16 %v98
    %v232 = vunpack.c.l.b16 %v99
    %v233 = vunpack.c.l.b16 %v100
    %v234 = vunpack.c.l.b16 %v101
    %v235 = vunpack.c.l.b16 %v102
    %v236 = vunpack.c.l.b16 %v103
    %v237 = vunpack.c.l.b16 %v104
    %v238 = vunpack.c.l.b16 %v105
    %v239 = vunpack.c.l.b16 %v106
    %v240 = vunpack.c.l.b16 %v107
    %v241 = vunpack.c.l.b16 %v108
    %v242 = vunpack.c.l.b16 %v109
    %v243 = vunpack.c.l.b16 %v110
    %v244 = vunpack.c.l.b16 %v111
    %v245 = vunpack.c.l.b16 %v112
    %v246 = vunpack.c.l.b16 %v113
    %v247 = vunpack.c.l.b16 %v114
    %v248 = vunpack.c.l.b16 %v115
    %v249 = vunpack.c.l.b16 %v116
    %v250 = vunpack.c.l.b16 %v117
    %v251 = vunpack.c.l.b16 %v118
    %v252 = vunpack.c.l.b16 %v119
    %v253 = vunpack.c.l.b16 %v120
    %v254 = vunpack.c.l.b16 %v121
    %v255 = vunpack.c.l.b16 %v122
    %v256 = vunpack.c.l.b16 %v123
    %v257 = vunpack.c.l.b16 %v124
    %v258 = vunpack.c.l.b16 %v125
    %v259 = vunpack.c.l.b16 %v126
    %v260 = vunpack.c.l.b16 %v127
    %v261 = vunpack.c.l.b16 %v128
    %v262 = vunpack.c.l.b16 %v129
    %v263 = vunpack.c.l.b16 %v130
    %v264 = vunpack.c.l.b16 %v131
    %v265 = vunpack.c.l.b16 %v132
    %v266 = vunpack.c.l.b16 %v133
    %v267 = vunpack.c.l.b16 %v134
    %v268 = vunpack.c.l.b16 %v135
    %v269 = vunpack.c.l.b16 %v136
    %v270 = vunpack.c.l.b16 %v137
    %v271 = vunpack.c.l.b16 %v138
    %v272 = vunpack.c.l.b16 %v139
    %v273 = vunpack.c.l.b16 %v140
    %v274 = vunpack.c.l.b16 %v141
    %v275 = vunpack.c.l.b16 %v142
    %v276 = vunpack.c.l.b16 %v143
    %v277 = vunpack.c.l.b16 %v144
    %v278 = vunpack.c.l.b16 %v145
    %v279 = vunpack.c.l.b16 %v146
    %v280 = vunpack.c.l.b16 %v147
    %v281 = vunpack.c.l.b16 %v148
    %v282 = vunpack.c.l.b16 %v149
    %v283 = vunpack.c.l.b16 %v150
    %v284 = vunpack.c.l.b16 %v151
    %v285 = vpack.c.b16 %v222, %v221
    %v286 = vpack.c.b16 %v224, %v223
    %v287 = vpack.c.b16 %v226, %v225
    %v288 = vpack.c.b16 %v228, %v227
    %v289 = vpack.c.b16 %v230, %v229
    %v290 = vpack.c.b16 %v232, %v231
    %v291 = vpack.c.b16 %v234, %v233
    %v292 = vpack.c.b16 %v236, %v235
    %v293 = vpack.c.b16 %v238, %v237
    %v294 = vpack.c.b16 %v240, %v239
    %v295 = vpack.c.b16 %v242, %v241
    %v296 = vpack.c.b16 %v244, %v243
    %v297 = vpack.c.b16 %v246, %v245
    %v298 = vpack.c.b16 %v248, %v247
    %v299 = vpack.c.b16 %v250, %v249
    %v300 = vpack.c.b16 %v252, %v251
    %v301 = vpack.c.b16 %v254, %v253
    %v302 = vpack.c.b16 %v256, %v255
    %v303 = vpack.c.b16 %v258, %v257
    %v304 = vpack.c.b16 %v260, %v259
    %v305 = vpack.c.b16 %v262, %v261
    %v306 = vpack.c.b16 %v264, %v263
    %v307 = vpack.c.b16 %v266, %v265
    %v308 = vpack.c.b16 %v268, %v267
    %v309 = vpack.c.b16 %v270, %v269
    %v310 = vpack.c.b16 %v272, %v271
    %v311 = vpack.c.b16 %v274, %v273
    %v312 = vpack.c.b16 %v276, %v275
    %v313 = vpack.c.b16 %v278, %v277
    %v314 = vpack.c.b16 %v280, %v279
    %v315 = vpack.c.b16 %v282, %v281
    %v316 = vpack.c.b16 %v284, %v283
    %349 = vmatprep.subr.bf16.mxu0 0
    %350 = vmatpush1.bf16.msra.mxu0 %v285
    %351 = vmatprep.subr.bf16.mxu0 0
    %352 = vmatpush1.bf16.msra.mxu0 %v286
    %353 = vmatprep.subr.bf16.mxu0 0
    %354 = vmatpush1.bf16.msra.mxu0 %v287
    %355 = vmatprep.subr.bf16.mxu0 0
    %356 = vmatpush1.bf16.msra.mxu0 %v288
    %357 = vmatprep.subr.bf16.mxu0 0
    %358 = vmatpush1.bf16.msra.mxu0 %v289
    %359 = vmatprep.subr.bf16.mxu0 0
    %360 = vmatpush1.bf16.msra.mxu0 %v290
    %361 = vmatprep.subr.bf16.mxu0 0
    %362 = vmatpush1.bf16.msra.mxu0 %v291
    %363 = vmatprep.subr.bf16.mxu0 0
    %364 = vmatpush1.bf16.msra.mxu0 %v292
    %365 = vmatprep.subr.bf16.mxu0 0
    %366 = vmatpush1.bf16.msra.mxu0 %v293
    %367 = vmatprep.subr.bf16.mxu0 0
    %368 = vmatpush1.bf16.msra.mxu0 %v294
    %369 = vmatprep.subr.bf16.mxu0 0
    %370 = vmatpush1.bf16.msra.mxu0 %v295
    %371 = vmatprep.subr.bf16.mxu0 0
    %372 = vmatpush1.bf16.msra.mxu0 %v296
    %373 = vmatprep.subr.bf16.mxu0 0
    %374 = vmatpush1.bf16.msra.mxu0 %v297
    %375 = vmatprep.subr.bf16.mxu0 0
    %376 = vmatpush1.bf16.msra.mxu0 %v298
    %377 = vmatprep.subr.bf16.mxu0 0
    %378 = vmatpush1.bf16.msra.mxu0 %v299
    %379 = vmatprep.subr.bf16.mxu0 0
    %380 = vmatpush1.bf16.msra.mxu0 %v300
    %381 = vmatprep.mubr.bf16.mxu0 %v153
    %382 = vmatmul.mubr.bf16.gmra.mrb[0].mxu0 %v152
    %v383 = vpop.f32.mrb[0].mxu0
    %v384 = vadd.f32 %v156, %v383
    %v385 = vpop.f32.mrb[0].mxu0
    %v386 = vpop.f32.mrb[0].mxu0
    %v387 = vpop.f32.mrb[0].mxu0
    %388 = vdwg.mxu0
    %389 = vmatprep.subr.bf16.mxu0 0
    %390 = vmatpush1.bf16.msra.mxu0 %v301
    %391 = vmatprep.subr.bf16.mxu0 0
    %392 = vmatpush1.bf16.msra.mxu0 %v302
    %393 = vmatprep.subr.bf16.mxu0 0
    %394 = vmatpush1.bf16.msra.mxu0 %v303
    %395 = vmatprep.subr.bf16.mxu0 0
    %396 = vmatpush1.bf16.msra.mxu0 %v304
    %397 = vmatprep.subr.bf16.mxu0 0
    %398 = vmatpush1.bf16.msra.mxu0 %v305
    %399 = vmatprep.subr.bf16.mxu0 0
    %400 = vmatpush1.bf16.msra.mxu0 %v306
    %401 = vmatprep.subr.bf16.mxu0 0
    %402 = vmatpush1.bf16.msra.mxu0 %v307
    %403 = vmatprep.subr.bf16.mxu0 0
    %404 = vmatpush1.bf16.msra.mxu0 %v308
    %405 = vmatprep.subr.bf16.mxu0 0
    %406 = vmatpush1.bf16.msra.mxu0 %v309
    %407 = vmatprep.subr.bf16.mxu0 0
    %408 = vmatpush1.bf16.msra.mxu0 %v310
    %409 = vmatprep.subr.bf16.mxu0 0
    %410 = vmatpush1.bf16.msra.mxu0 %v311
    %411 = vmatprep.subr.bf16.mxu0 0
    %412 = vmatpush1.bf16.msra.mxu0 %v312
    %413 = vmatprep.subr.bf16.mxu0 0
    %414 = vmatpush1.bf16.msra.mxu0 %v313
    %415 = vmatprep.subr.bf16.mxu0 0
    %416 = vmatpush1.bf16.msra.mxu0 %v314
    %417 = vmatprep.subr.bf16.mxu0 0
    %418 = vmatpush1.bf16.msra.mxu0 %v315
    %419 = vmatprep.subr.bf16.mxu0 0
    %420 = vmatpush1.bf16.msra.mxu0 %v316
    %421 = vmatprep.mubr.bf16.mxu0 %v155
    %422 = vmatmul.mubr.bf16.gmra.mrb[0].mxu0 %v154
    %v423 = vpop.f32.mrb[0].mxu0
    %v424 = vadd.f32 %v384, %v423
    %v425 = vpop.f32.mrb[0].mxu0
    %v426 = vpop.f32.mrb[0].mxu0
    %v427 = vpop.f32.mrb[0].mxu0
    %428 = vdwg.mxu0
    %v429 = vmax.f32 %v424, 0.0
    %v430 = vld [vmem:[#allocation5] sm:$0xff]
    %v431 = vld [vmem:[#allocation7 + $0x100] sm:$0xf]
    %v432 = vld [vmem:[#allocation7 + $0x104] sm:$0xf]
    %v433 = vld [vmem:[#allocation7 + $0x108] sm:$0xf]
    %v434 = vld [vmem:[#allocation7 + $0x10c] sm:$0xf]
    %v435 = vld [vmem:[#allocation7 + $0x110] sm:$0xf]
    %v436 = vld [vmem:[#allocation7 + $0x114] sm:$0xf]
    %v437 = vld [vmem:[#allocation7 + $0x118] sm:$0xf]
    %v438 = vld [vmem:[#allocation7 + $0x11c] sm:$0xf]
    %v439 = vld [vmem:[#allocation7 + $0x120] sm:$0xf]
    %v440 = vld [vmem:[#allocation7 + $0x124] sm:$0xf]
    %v441 = vld [vmem:[#allocation7 + $0x128] sm:$0xf]
    %v442 = vld [vmem:[#allocation7 + $0x12c] sm:$0xf]
    %v443 = vld [vmem:[#allocation7 + $0x130] sm:$0xf]
    %v444 = vld [vmem:[#allocation7 + $0x134] sm:$0xf]
    %v445 = vld [vmem:[#allocation7 + $0x138] sm:$0xf]
    %v446 = vld [vmem:[#allocation7 + $0x13c] sm:$0xf]
    %v447 = vpack.c.bf16 %v430, %v430
    %v448 = vld [vmem:[#allocation10 + $0x8] ss:$0 sm:$0xff]
    %v465 = vunpack.c.l.b16 %v431
    %v466 = vunpack.c.l.b16 %v432
    %v467 = vunpack.c.l.b16 %v433
    %v468 = vunpack.c.l.b16 %v434
    %v469 = vunpack.c.l.b16 %v435
    %v470 = vunpack.c.l.b16 %v436
    %v471 = vunpack.c.l.b16 %v437
    %v472 = vunpack.c.l.b16 %v438
    %v473 = vunpack.c.l.b16 %v439
    %v474 = vunpack.c.l.b16 %v440
    %v475 = vunpack.c.l.b16 %v441
    %v476 = vunpack.c.l.b16 %v442
    %v477 = vunpack.c.l.b16 %v443
    %v478 = vunpack.c.l.b16 %v444
    %v479 = vunpack.c.l.b16 %v445
    %v480 = vunpack.c.l.b16 %v446
    %v481 = vpack.c.b16 %v466, %v465
    %v482 = vpack.c.b16 %v468, %v467
    %v483 = vpack.c.b16 %v470, %v469
    %v484 = vpack.c.b16 %v472, %v471
    %v485 = vpack.c.b16 %v474, %v473
    %v486 = vpack.c.b16 %v476, %v475
    %v487 = vpack.c.b16 %v478, %v477
    %v488 = vpack.c.b16 %v480, %v479
    %497 = vmatprep.subr.bf16.mxu0 0
    %498 = vmatpush1.bf16.msra.mxu0 %v481
    %499 = vmatprep.subr.bf16.mxu0 0
    %500 = vmatpush1.bf16.msra.mxu0 %v482
    %501 = vmatprep.subr.bf16.mxu0 0
    %502 = vmatpush1.bf16.msra.mxu0 %v483
    %503 = vmatprep.subr.bf16.mxu0 0
    %504 = vmatpush1.bf16.msra.mxu0 %v484
    %505 = vmatprep.subr.bf16.mxu0 0
    %506 = vmatpush1.bf16.msra.mxu0 %v485
    %507 = vmatprep.subr.bf16.mxu0 0
    %508 = vmatpush1.bf16.msra.mxu0 %v486
    %509 = vmatprep.subr.bf16.mxu0 0
    %510 = vmatpush1.bf16.msra.mxu0 %v487
    %511 = vmatprep.subr.bf16.mxu0 0
    %512 = vmatpush1.bf16.msra.mxu0 %v488
    %513 = vmatprep.subr.bf16.mxu0 0
    %514 = vmatpush1.bf16.msra.mxu0 0
    %515 = vmatprep.subr.bf16.mxu0 0
    %516 = vmatpush1.bf16.msra.mxu0 0
    %517 = vmatprep.subr.bf16.mxu0 0
    %518 = vmatpush1.bf16.msra.mxu0 0
    %519 = vmatprep.subr.bf16.mxu0 0
    %520 = vmatpush1.bf16.msra.mxu0 0
    %521 = vmatprep.subr.bf16.mxu0 0
    %522 = vmatpush1.bf16.msra.mxu0 0
    %523 = vmatprep.subr.bf16.mxu0 0
    %524 = vmatpush1.bf16.msra.mxu0 0
    %525 = vmatprep.subr.bf16.mxu0 0
    %526 = vmatpush1.bf16.msra.mxu0 0
    %527 = vmatprep.subr.bf16.mxu0 0
    %528 = vmatpush1.bf16.msra.mxu0 0
    %529 = vmatprep.mubr.bf16.mxu0 0
    %530 = vmatmul.mubr.bf16.gmra.mrb[0].mxu0 %v447
    %v531 = vpop.f32.mrb[0].mxu0
    %v532 = vadd.f32 %v448, %v531
    %v533 = vpop.f32.mrb[0].mxu0
    %v534 = vpop.f32.mrb[0].mxu0
    %v535 = vpop.f32.mrb[0].mxu0
    %536 = vdwg.mxu0
    %v537 = vmax.f32 %v532, 0.0
    %v538 = vld [vmem:[#allocation8] sm:$0xff]
    %v539 = vld [vmem:[#allocation8 + $0x8] sm:$0xff]
    %v540 = vld [vmem:[#allocation8 + $0x10] sm:$0xff]
    %v541 = vld [vmem:[#allocation8 + $0x18] sm:$0xff]
    %v542 = vld [vmem:[#allocation8 + $0x20] sm:$0xff]
    %v543 = vld [vmem:[#allocation8 + $0x28] sm:$0xff]
    %v544 = vld [vmem:[#allocation8 + $0x30] sm:$0xff]
    %v545 = vld [vmem:[#allocation8 + $0x38] sm:$0xff]
    %v546 = vld [vmem:[#allocation8 + $0x40] sm:$0xff]
    %v547 = vld [vmem:[#allocation8 + $0x48] sm:$0xff]
    %v548 = vld [vmem:[#allocation8 + $0x50] sm:$0xff]
    %v549 = vld [vmem:[#allocation8 + $0x58] sm:$0xff]
    %v550 = vld [vmem:[#allocation8 + $0x60] sm:$0xff]
    %v551 = vld [vmem:[#allocation8 + $0x68] sm:$0xff]
    %v552 = vld [vmem:[#allocation8 + $0x70] sm:$0xff]
    %v553 = vld [vmem:[#allocation8 + $0x78] sm:$0xff]
    %v554 = vpack.c.bf16 %v429, %v429
    %v571 = vunpack.c.l.b16 %v538
    %v572 = vunpack.c.h.b16 %v538
    %v573 = vunpack.c.l.b16 %v539
    %v574 = vunpack.c.h.b16 %v539
    %v575 = vunpack.c.l.b16 %v540
    %v576 = vunpack.c.h.b16 %v540
    %v577 = vunpack.c.l.b16 %v541
    %v578 = vunpack.c.h.b16 %v541
    %v579 = vunpack.c.l.b16 %v542
    %v580 = vunpack.c.h.b16 %v542
    %v581 = vunpack.c.l.b16 %v543
    %v582 = vunpack.c.h.b16 %v543
    %v583 = vunpack.c.l.b16 %v544
    %v584 = vunpack.c.h.b16 %v544
    %v585 = vunpack.c.l.b16 %v545
    %v586 = vunpack.c.h.b16 %v545
    %v587 = vunpack.c.l.b16 %v546
    %v588 = vunpack.c.h.b16 %v546
    %v589 = vunpack.c.l.b16 %v547
    %v590 = vunpack.c.h.b16 %v547
    %v591 = vunpack.c.l.b16 %v548
    %v592 = vunpack.c.h.b16 %v548
    %v593 = vunpack.c.l.b16 %v549
    %v594 = vunpack.c.h.b16 %v549
    %v595 = vunpack.c.l.b16 %v550
    %v596 = vunpack.c.h.b16 %v550
    %v597 = vunpack.c.l.b16 %v551
    %v598 = vunpack.c.h.b16 %v551
    %v599 = vunpack.c.l.b16 %v552
    %v600 = vunpack.c.h.b16 %v552
    %v601 = vunpack.c.l.b16 %v553
    %v602 = vunpack.c.h.b16 %v553
    %v603 = vpack.c.b16 %v573, %v571
    %v604 = vpack.c.b16 %v574, %v572
    %v605 = vpack.c.b16 %v577, %v575
    %v606 = vpack.c.b16 %v578, %v576
    %v607 = vpack.c.b16 %v581, %v579
    %v608 = vpack.c.b16 %v582, %v580
    %v609 = vpack.c.b16 %v585, %v583
    %v610 = vpack.c.b16 %v586, %v584
    %v611 = vpack.c.b16 %v589, %v587
    %v612 = vpack.c.b16 %v590, %v588
    %v613 = vpack.c.b16 %v593, %v591
    %v614 = vpack.c.b16 %v594, %v592
    %v615 = vpack.c.b16 %v597, %v595
    %v616 = vpack.c.b16 %v598, %v596
    %v617 = vpack.c.b16 %v601, %v599
    %v618 = vpack.c.b16 %v602, %v600
    %635 = vmatprep.subr.bf16.mxu0 %v604
    %636 = vmatpush1.bf16.msra.mxu0 %v603
    %637 = vmatprep.subr.bf16.mxu0 %v606
    %638 = vmatpush1.bf16.msra.mxu0 %v605
    %639 = vmatprep.subr.bf16.mxu0 %v608
    %640 = vmatpush1.bf16.msra.mxu0 %v607
    %641 = vmatprep.subr.bf16.mxu0 %v610
    %642 = vmatpush1.bf16.msra.mxu0 %v609
    %643 = vmatprep.subr.bf16.mxu0 %v612
    %644 = vmatpush1.bf16.msra.mxu0 %v611
    %645 = vmatprep.subr.bf16.mxu0 %v614
    %646 = vmatpush1.bf16.msra.mxu0 %v613
    %647 = vmatprep.subr.bf16.mxu0 %v616
    %648 = vmatpush1.bf16.msra.mxu0 %v615
    %649 = vmatprep.subr.bf16.mxu0 %v618
    %650 = vmatpush1.bf16.msra.mxu0 %v617
    %651 = vmatprep.subr.bf16.mxu0 0
    %652 = vmatpush1.bf16.msra.mxu0 0
    %653 = vmatprep.subr.bf16.mxu0 0
    %654 = vmatpush1.bf16.msra.mxu0 0
    %655 = vmatprep.subr.bf16.mxu0 0
    %656 = vmatpush1.bf16.msra.mxu0 0
    %657 = vmatprep.subr.bf16.mxu0 0
    %658 = vmatpush1.bf16.msra.mxu0 0
    %659 = vmatprep.subr.bf16.mxu0 0
    %660 = vmatpush1.bf16.msra.mxu0 0
    %661 = vmatprep.subr.bf16.mxu0 0
    %662 = vmatpush1.bf16.msra.mxu0 0
    %663 = vmatprep.subr.bf16.mxu0 0
    %664 = vmatpush1.bf16.msra.mxu0 0
    %665 = vmatprep.subr.bf16.mxu0 0
    %666 = vmatpush1.bf16.msra.mxu0 0
    %667 = vmatprep.mubr.bf16.mxu0 0
    %668 = vmatmul.mubr.bf16.gmra.mrb[0].mxu0 %v554
    %v669 = vpop.f32.mrb[0].mxu0
    %v670 = vadd.f32 0.0, %v669
    %v671 = vpop.f32.mrb[0].mxu0
    %v672 = vadd.f32 0.0, %v671
    %v673 = vpop.f32.mrb[0].mxu0
    %v674 = vpop.f32.mrb[0].mxu0
    %675 = vdwg.mxu0
    %v676 = vld [vmem:[#allocation8 + $0x80] sm:$0xff]
    %v677 = vld [vmem:[#allocation8 + $0x88] sm:$0xff]
    %v678 = vld [vmem:[#allocation8 + $0x90] sm:$0xff]
    %v679 = vld [vmem:[#allocation8 + $0x98] sm:$0xff]
    %v680 = vld [vmem:[#allocation8 + $0xa0] sm:$0xff]
    %v681 = vld [vmem:[#allocation8 + $0xa8] sm:$0xff]
    %v682 = vld [vmem:[#allocation8 + $0xb0] sm:$0xff]
    %v683 = vld [vmem:[#allocation8 + $0xb8] sm:$0xff]
    %v684 = vld [vmem:[#allocation8 + $0xc0] sm:$0xff]
    %v685 = vld [vmem:[#allocation8 + $0xc8] sm:$0xff]
    %v686 = vld [vmem:[#allocation8 + $0xd0] sm:$0xff]
    %v687 = vld [vmem:[#allocation8 + $0xd8] sm:$0xff]
    %v688 = vld [vmem:[#allocation8 + $0xe0] sm:$0xff]
    %v689 = vld [vmem:[#allocation8 + $0xe8] sm:$0xff]
    %v690 = vld [vmem:[#allocation8 + $0xf0] sm:$0xff]
    %v691 = vld [vmem:[#allocation8 + $0xf8] sm:$0xff]
    %v692 = vpack.c.bf16 %v537, %v537
    %v709 = vunpack.c.l.b16 %v676
    %v710 = vunpack.c.h.b16 %v676
    %v711 = vunpack.c.l.b16 %v677
    %v712 = vunpack.c.h.b16 %v677
    %v713 = vunpack.c.l.b16 %v678
    %v714 = vunpack.c.h.b16 %v678
    %v715 = vunpack.c.l.b16 %v679
    %v716 = vunpack.c.h.b16 %v679
    %v717 = vunpack.c.l.b16 %v680
    %v718 = vunpack.c.h.b16 %v680
    %v719 = vunpack.c.l.b16 %v681
    %v720 = vunpack.c.h.b16 %v681
    %v721 = vunpack.c.l.b16 %v682
    %v722 = vunpack.c.h.b16 %v682
    %v723 = vunpack.c.l.b16 %v683
    %v724 = vunpack.c.h.b16 %v683
    %v725 = vunpack.c.l.b16 %v684
    %v726 = vunpack.c.h.b16 %v684
    %v727 = vunpack.c.l.b16 %v685
    %v728 = vunpack.c.h.b16 %v685
    %v729 = vunpack.c.l.b16 %v686
    %v730 = vunpack.c.h.b16 %v686
    %v731 = vunpack.c.l.b16 %v687
    %v732 = vunpack.c.h.b16 %v687
    %v733 = vunpack.c.l.b16 %v688
    %v734 = vunpack.c.h.b16 %v688
    %v735 = vunpack.c.l.b16 %v689
    %v736 = vunpack.c.h.b16 %v689
    %v737 = vunpack.c.l.b16 %v690
    %v738 = vunpack.c.h.b16 %v690
    %v739 = vunpack.c.l.b16 %v691
    %v740 = vunpack.c.h.b16 %v691
    %v741 = vpack.c.b16 %v711, %v709
    %v742 = vpack.c.b16 %v712, %v710
    %v743 = vpack.c.b16 %v715, %v713
    %v744 = vpack.c.b16 %v716, %v714
    %v745 = vpack.c.b16 %v719, %v717
    %v746 = vpack.c.b16 %v720, %v718
    %v747 = vpack.c.b16 %v723, %v721
    %v748 = vpack.c.b16 %v724, %v722
    %v749 = vpack.c.b16 %v727, %v725
    %v750 = vpack.c.b16 %v728, %v726
    %v751 = vpack.c.b16 %v731, %v729
    %v752 = vpack.c.b16 %v732, %v730
    %v753 = vpack.c.b16 %v735, %v733
    %v754 = vpack.c.b16 %v736, %v734
    %v755 = vpack.c.b16 %v739, %v737
    %v756 = vpack.c.b16 %v740, %v738
    %773 = vmatprep.subr.bf16.mxu0 %v742
    %774 = vmatpush1.bf16.msra.mxu0 %v741
    %775 = vmatprep.subr.bf16.mxu0 %v744
    %776 = vmatpush1.bf16.msra.mxu0 %v743
    %777 = vmatprep.subr.bf16.mxu0 %v746
    %778 = vmatpush1.bf16.msra.mxu0 %v745
    %779 = vmatprep.subr.bf16.mxu0 %v748
    %780 = vmatpush1.bf16.msra.mxu0 %v747
    %781 = vmatprep.subr.bf16.mxu0 %v750
    %782 = vmatpush1.bf16.msra.mxu0 %v749
    %783 = vmatprep.subr.bf16.mxu0 %v752
    %784 = vmatpush1.bf16.msra.mxu0 %v751
    %785 = vmatprep.subr.bf16.mxu0 %v754
    %786 = vmatpush1.bf16.msra.mxu0 %v753
    %787 = vmatprep.subr.bf16.mxu0 %v756
    %788 = vmatpush1.bf16.msra.mxu0 %v755
    %789 = vmatprep.subr.bf16.mxu0 0
    %790 = vmatpush1.bf16.msra.mxu0 0
    %791 = vmatprep.subr.bf16.mxu0 0
    %792 = vmatpush1.bf16.msra.mxu0 0
    %793 = vmatprep.subr.bf16.mxu0 0
    %794 = vmatpush1.bf16.msra.mxu0 0
    %795 = vmatprep.subr.bf16.mxu0 0
    %796 = vmatpush1.bf16.msra.mxu0 0
    %797 = vmatprep.subr.bf16.mxu0 0
    %798 = vmatpush1.bf16.msra.mxu0 0
    %799 = vmatprep.subr.bf16.mxu0 0
    %800 = vmatpush1.bf16.msra.mxu0 0
    %801 = vmatprep.subr.bf16.mxu0 0
    %802 = vmatpush1.bf16.msra.mxu0 0
    %803 = vmatprep.subr.bf16.mxu0 0
    %804 = vmatpush1.bf16.msra.mxu0 0
    %805 = vmatprep.mubr.bf16.mxu0 0
    %806 = vmatmul.mubr.bf16.gmra.mrb[0].mxu0 %v692
    %v807 = vpop.f32.mrb[0].mxu0
    %v808 = vadd.f32 0.0, %v807
    %v809 = vpop.f32.mrb[0].mxu0
    %v810 = vadd.f32 0.0, %v809
    %v811 = vpop.f32.mrb[0].mxu0
    %v812 = vpop.f32.mrb[0].mxu0
    %813 = vdwg.mxu0
    %s814 = scalar_lea.vmem [#allocation10], 1
    %v815 = vld [vmem:[%s814] ss:$8 sm:$0xf]
    %v817 = vlaneseq
    %v818 = vshrl.u32 %v817, 7
    %v819 = vsub.s32 0, %v818
    %v820 = vrot.slane %v815, %v819
    %v821 = vlaneseq
    %v822 = vshrl.u32 %v821, 7
    %v823 = vsub.s32 1, %v822
    %v824 = vrot.slane %v815, %v823
    %v825 = vlaneseq
    %v826 = vshrl.u32 %v825, 7
    %v827 = vsub.s32 2, %v826
    %v828 = vrot.slane %v815, %v827
    %v829 = vlaneseq
    %v830 = vshrl.u32 %v829, 7
    %v831 = vsub.s32 3, %v830
    %v832 = vrot.slane %v815, %v831
    %v837 = vadd.f32 %v670, %v820
    %v838 = vadd.f32 %v672, %v824
    %v839 = vadd.f32 %v808, %v828
    %v840 = vadd.f32 %v810, %v832
    %v841 = vmax.f32 %v837, 0.0
    %v842 = vmax.f32 %v838, 0.0
    %v843 = vmax.f32 %v839, 0.0
    %v844 = vmax.f32 %v840, 0.0
    %v845 = vrot.slane %v841, 4
    %v846 = vadd.f32 %v841, %v845
    %v847 = vrot.slane %v846, 2
    %v848 = vadd.f32 %v846, %v847
    %v849 = vrot.slane %v848, 1
    %v850 = vadd.f32 %v848, %v849
    %v851 = vrot.slane %v842, 4
    %v852 = vadd.f32 %v842, %v851
    %v853 = vrot.slane %v852, 2
    %v854 = vadd.f32 %v852, %v853
    %v855 = vrot.slane %v854, 1
    %v856 = vadd.f32 %v854, %v855
    %v857 = vrot.slane %v843, 4
    %v858 = vadd.f32 %v843, %v857
    %v859 = vrot.slane %v858, 2
    %v860 = vadd.f32 %v858, %v859
    %v861 = vrot.slane %v860, 1
    %v862 = vadd.f32 %v860, %v861
    %v863 = vrot.slane %v844, 4
    %v864 = vadd.f32 %v844, %v863
    %v865 = vrot.slane %v864, 2
    %v866 = vadd.f32 %v864, %v865
    %v867 = vrot.slane %v866, 1
    %v868 = vadd.f32 %v866, %v867
    %v869 = vrcp.pop 8.0
    %v870 = vmul.f32 %v850, %v869
    %v871 = vmul.f32 %v856, %v869
    %v872 = vmul.f32 %v862, %v869
    %v873 = vmul.f32 %v868, %v869
    %v874 = vsub.f32 %v841, %v870
    %v875 = vsub.f32 %v842, %v871
    %v876 = vsub.f32 %v843, %v872
    %v877 = vsub.f32 %v844, %v873
    %v878 = vmul.f32 %v874, %v874
    %v879 = vmul.f32 %v875, %v875
    %v880 = vmul.f32 %v876, %v876
    %v881 = vmul.f32 %v877, %v877
    %v882 = vrot.slane %v878, 4
    %v883 = vadd.f32 %v878, %v882
    %v884 = vrot.slane %v883, 2
    %v885 = vadd.f32 %v883, %v884
    %v886 = vrot.slane %v885, 1
    %v887 = vadd.f32 %v885, %v886
    %v888 = vrot.slane %v879, 4
    %v889 = vadd.f32 %v879, %v888
    %v890 = vrot.slane %v889, 2
    %v891 = vadd.f32 %v889, %v890
    %v892 = vrot.slane %v891, 1
    %v893 = vadd.f32 %v891, %v892
    %v894 = vrot.slane %v880, 4
    %v895 = vadd.f32 %v880, %v894
    %v896 = vrot.slane %v895, 2
    %v897 = vadd.f32 %v895, %v896
    %v898 = vrot.slane %v897, 1
    %v899 = vadd.f32 %v897, %v898
    %v900 = vrot.slane %v881, 4
    %v901 = vadd.f32 %v881, %v900
    %v902 = vrot.slane %v901, 2
    %v903 = vadd.f32 %v901, %v902
    %v904 = vrot.slane %v903, 1
    %v905 = vadd.f32 %v903, %v904
    %v906 = vmul.f32 %v887, %v869
    %v907 = vmul.f32 %v893, %v869
    %v908 = vmul.f32 %v899, %v869
    %v909 = vmul.f32 %v905, %v869
    %v910 = vadd.f32 %v906, 1e-05
    %v911 = vadd.f32 %v907, 1e-05
    %v912 = vadd.f32 %v908, 1e-05
    %v913 = vadd.f32 %v909, 1e-05
    %v914 = vrsqrt.pop %v910
    %v915 = vrsqrt.pop %v911
    %v916 = vrsqrt.pop %v912
    %v917 = vrsqrt.pop %v913
    %v918 = vmul.f32 %v874, %v914
    %v919 = vmul.f32 %v875, %v915
    %v920 = vmul.f32 %v876, %v916
    %v921 = vmul.f32 %v877, %v917
    %s922 = scalar_lea.vmem [#allocation10], 2
    %v923 = vld [vmem:[%s922] ss:$8 sm:$0xf]
    %v925 = vlaneseq
    %v926 = vshrl.u32 %v925, 7
    %v927 = vsub.s32 0, %v926
    %v928 = vrot.slane %v923, %v927
    %v929 = vlaneseq
    %v930 = vshrl.u32 %v929, 7
    %v931 = vsub.s32 1, %v930
    %v932 = vrot.slane %v923, %v931
    %v933 = vlaneseq
    %v934 = vshrl.u32 %v933, 7
    %v935 = vsub.s32 2, %v934
    %v936 = vrot.slane %v923, %v935
    %v937 = vlaneseq
    %v938 = vshrl.u32 %v937, 7
    %v939 = vsub.s32 3, %v938
    %v940 = vrot.slane %v923, %v939
    %v945 = vmul.f32 %v918, %v928
    %v946 = vmul.f32 %v919, %v932
    %v947 = vmul.f32 %v920, %v936
    %v948 = vmul.f32 %v921, %v940
    %s949 = scalar_lea.vmem [#allocation10], 3
    %v950 = vld [vmem:[%s949] ss:$8 sm:$0xf]
    %v952 = vlaneseq
    %v953 = vshrl.u32 %v952, 7
    %v954 = vsub.s32 0, %v953
    %v955 = vrot.slane %v950, %v954
    %v956 = vlaneseq
    %v957 = vshrl.u32 %v956, 7
    %v958 = vsub.s32 1, %v957
    %v959 = vrot.slane %v950, %v958
    %v960 = vlaneseq
    %v961 = vshrl.u32 %v960, 7
    %v962 = vsub.s32 2, %v961
    %v963 = vrot.slane %v950, %v962
    %v964 = vlaneseq
    %v965 = vshrl.u32 %v964, 7
    %v966 = vsub.s32 3, %v965
    %v967 = vrot.slane %v950, %v966
    %v972 = vadd.f32 %v945, %v955
    %v973 = vadd.f32 %v946, %v959
    %v974 = vadd.f32 %v947, %v963
    %v975 = vadd.f32 %v948, %v967
    %v976 = vadd.f32 %v972, %v974
    %v977 = vadd.f32 %v975, %v973
    %v978 = vld [vmem:[#allocation7 + $0x140] sm:$0xf]
    %v979 = vld [vmem:[#allocation7 + $0x144] sm:$0xf]
    %v980 = vld [vmem:[#allocation7 + $0x148] sm:$0xf]
    %v981 = vld [vmem:[#allocation7 + $0x14c] sm:$0xf]
    %v982 = vld [vmem:[#allocation7 + $0x150] sm:$0xf]
    %v983 = vld [vmem:[#allocation7 + $0x154] sm:$0xf]
    %v984 = vld [vmem:[#allocation7 + $0x158] sm:$0xf]
    %v985 = vld [vmem:[#allocation7 + $0x15c] sm:$0xf]
    %v986 = vld [vmem:[#allocation7 + $0x160] sm:$0xf]
    %v987 = vld [vmem:[#allocation7 + $0x164] sm:$0xf]
    %v988 = vld [vmem:[#allocation7 + $0x168] sm:$0xf]
    %v989 = vld [vmem:[#allocation7 + $0x16c] sm:$0xf]
    %v990 = vld [vmem:[#allocation7 + $0x170] sm:$0xf]
    %v991 = vld [vmem:[#allocation7 + $0x174] sm:$0xf]
    %v992 = vld [vmem:[#allocation7 + $0x178] sm:$0xf]
    %v993 = vld [vmem:[#allocation7 + $0x17c] sm:$0xf]
    %v994 = vpack.c.bf16 %v976, %v976
    %v995 = vld [vmem:[#allocation10 + $0x10] ss:$0 sm:$0xff]
    %v1012 = vunpack.c.l.b16 %v978
    %v1013 = vunpack.c.l.b16 %v979
    %v1014 = vunpack.c.l.b16 %v980
    %v1015 = vunpack.c.l.b16 %v981
    %v1016 = vunpack.c.l.b16 %v982
    %v1017 = vunpack.c.l.b16 %v983
    %v1018 = vunpack.c.l.b16 %v984
    %v1019 = vunpack.c.l.b16 %v985
    %v1020 = vunpack.c.l.b16 %v986
    %v1021 = vunpack.c.l.b16 %v987
    %v1022 = vunpack.c.l.b16 %v988
    %v1023 = vunpack.c.l.b16 %v989
    %v1024 = vunpack.c.l.b16 %v990
    %v1025 = vunpack.c.l.b16 %v991
    %v1026 = vunpack.c.l.b16 %v992
    %v1027 = vunpack.c.l.b16 %v993
    %v1028 = vpack.c.b16 %v1013, %v1012
    %v1029 = vpack.c.b16 %v1015, %v1014
    %v1030 = vpack.c.b16 %v1017, %v1016
    %v1031 = vpack.c.b16 %v1019, %v1018
    %v1032 = vpack.c.b16 %v1021, %v1020
    %v1033 = vpack.c.b16 %v1023, %v1022
    %v1034 = vpack.c.b16 %v1025, %v1024
    %v1035 = vpack.c.b16 %v1027, %v1026
    %1044 = vmatprep.subr.bf16.mxu0 0
    %1045 = vmatpush1.bf16.msra.mxu0 %v1028
    %1046 = vmatprep.subr.bf16.mxu0 0
    %1047 = vmatpush1.bf16.msra.mxu0 %v1029
    %1048 = vmatprep.subr.bf16.mxu0 0
    %1049 = vmatpush1.bf16.msra.mxu0 %v1030
    %1050 = vmatprep.subr.bf16.mxu0 0
    %1051 = vmatpush1.bf16.msra.mxu0 %v1031
    %1052 = vmatprep.subr.bf16.mxu0 0
    %1053 = vmatpush1.bf16.msra.mxu0 %v1032
    %1054 = vmatprep.subr.bf16.mxu0 0
    %1055 = vmatpush1.bf16.msra.mxu0 %v1033
    %1056 = vmatprep.subr.bf16.mxu0 0
    %1057 = vmatpush1.bf16.msra.mxu0 %v1034
    %1058 = vmatprep.subr.bf16.mxu0 0
    %1059 = vmatpush1.bf16.msra.mxu0 %v1035
    %1060 = vmatprep.subr.bf16.mxu0 0
    %1061 = vmatpush1.bf16.msra.mxu0 0
    %1062 = vmatprep.subr.bf16.mxu0 0
    %1063 = vmatpush1.bf16.msra.mxu0 0
    %1064 = vmatprep.subr.bf16.mxu0 0
    %1065 = vmatpush1.bf16.msra.mxu0 0
    %1066 = vmatprep.subr.bf16.mxu0 0
    %1067 = vmatpush1.bf16.msra.mxu0 0
    %1068 = vmatprep.subr.bf16.mxu0 0
    %1069 = vmatpush1.bf16.msra.mxu0 0
    %1070 = vmatprep.subr.bf16.mxu0 0
    %1071 = vmatpush1.bf16.msra.mxu0 0
    %1072 = vmatprep.subr.bf16.mxu0 0
    %1073 = vmatpush1.bf16.msra.mxu0 0
    %1074 = vmatprep.subr.bf16.mxu0 0
    %1075 = vmatpush1.bf16.msra.mxu0 0
    %1076 = vmatprep.mubr.bf16.mxu0 0
    %1077 = vmatmul.mubr.bf16.gmra.mrb[0].mxu0 %v994
    %v1078 = vpop.f32.mrb[0].mxu0
    %v1079 = vadd.f32 %v995, %v1078
    %v1080 = vpop.f32.mrb[0].mxu0
    %v1081 = vpop.f32.mrb[0].mxu0
    %v1082 = vpop.f32.mrb[0].mxu0
    %1083 = vdwg.mxu0
    %v1084 = vmax.f32 %v1079, 0.0
    %v1085 = vld [vmem:[#allocation7 + $0x180] sm:$0xf]
    %v1086 = vld [vmem:[#allocation7 + $0x184] sm:$0xf]
    %v1087 = vld [vmem:[#allocation7 + $0x188] sm:$0xf]
    %v1088 = vld [vmem:[#allocation7 + $0x18c] sm:$0xf]
    %v1089 = vld [vmem:[#allocation7 + $0x190] sm:$0xf]
    %v1090 = vld [vmem:[#allocation7 + $0x194] sm:$0xf]
    %v1091 = vld [vmem:[#allocation7 + $0x198] sm:$0xf]
    %v1092 = vld [vmem:[#allocation7 + $0x19c] sm:$0xf]
    %v1093 = vld [vmem:[#allocation7 + $0x1a0] sm:$0xf]
    %v1094 = vld [vmem:[#allocation7 + $0x1a4] sm:$0xf]
    %v1095 = vld [vmem:[#allocation7 + $0x1a8] sm:$0xf]
    %v1096 = vld [vmem:[#allocation7 + $0x1ac] sm:$0xf]
    %v1097 = vld [vmem:[#allocation7 + $0x1b0] sm:$0xf]
    %v1098 = vld [vmem:[#allocation7 + $0x1b4] sm:$0xf]
    %v1099 = vld [vmem:[#allocation7 + $0x1b8] sm:$0xf]
    %v1100 = vld [vmem:[#allocation7 + $0x1bc] sm:$0xf]
    %v1101 = vpack.c.bf16 %v977, %v977
    %v1102 = vld [vmem:[#allocation10 + $0x18] ss:$0 sm:$0xff]
    %v1119 = vunpack.c.l.b16 %v1085
    %v1120 = vunpack.c.l.b16 %v1086
    %v1121 = vunpack.c.l.b16 %v1087
    %v1122 = vunpack.c.l.b16 %v1088
    %v1123 = vunpack.c.l.b16 %v1089
    %v1124 = vunpack.c.l.b16 %v1090
    %v1125 = vunpack.c.l.b16 %v1091
    %v1126 = vunpack.c.l.b16 %v1092
    %v1127 = vunpack.c.l.b16 %v1093
    %v1128 = vunpack.c.l.b16 %v1094
    %v1129 = vunpack.c.l.b16 %v1095
    %v1130 = vunpack.c.l.b16 %v1096
    %v1131 = vunpack.c.l.b16 %v1097
    %v1132 = vunpack.c.l.b16 %v1098
    %v1133 = vunpack.c.l.b16 %v1099
    %v1134 = vunpack.c.l.b16 %v1100
    %v1135 = vpack.c.b16 %v1120, %v1119
    %v1136 = vpack.c.b16 %v1122, %v1121
    %v1137 = vpack.c.b16 %v1124, %v1123
    %v1138 = vpack.c.b16 %v1126, %v1125
    %v1139 = vpack.c.b16 %v1128, %v1127
    %v1140 = vpack.c.b16 %v1130, %v1129
    %v1141 = vpack.c.b16 %v1132, %v1131
    %v1142 = vpack.c.b16 %v1134, %v1133
    %1151 = vmatprep.subr.bf16.mxu0 0
    %1152 = vmatpush1.bf16.msra.mxu0 %v1135
    %1153 = vmatprep.subr.bf16.mxu0 0
    %1154 = vmatpush1.bf16.msra.mxu0 %v1136
    %1155 = vmatprep.subr.bf16.mxu0 0
    %1156 = vmatpush1.bf16.msra.mxu0 %v1137
    %1157 = vmatprep.subr.bf16.mxu0 0
    %1158 = vmatpush1.bf16.msra.mxu0 %v1138
    %1159 = vmatprep.subr.bf16.mxu0 0
    %1160 = vmatpush1.bf16.msra.mxu0 %v1139
    %1161 = vmatprep.subr.bf16.mxu0 0
    %1162 = vmatpush1.bf16.msra.mxu0 %v1140
    %1163 = vmatprep.subr.bf16.mxu0 0
    %1164 = vmatpush1.bf16.msra.mxu0 %v1141
    %1165 = vmatprep.subr.bf16.mxu0 0
    %1166 = vmatpush1.bf16.msra.mxu0 %v1142
    %1167 = vmatprep.subr.bf16.mxu0 0
    %1168 = vmatpush1.bf16.msra.mxu0 0
    %1169 = vmatprep.subr.bf16.mxu0 0
    %1170 = vmatpush1.bf16.msra.mxu0 0
    %1171 = vmatprep.subr.bf16.mxu0 0
    %1172 = vmatpush1.bf16.msra.mxu0 0
    %1173 = vmatprep.subr.bf16.mxu0 0
    %1174 = vmatpush1.bf16.msra.mxu0 0
    %1175 = vmatprep.subr.bf16.mxu0 0
    %1176 = vmatpush1.bf16.msra.mxu0 0
    %1177 = vmatprep.subr.bf16.mxu0 0
    %1178 = vmatpush1.bf16.msra.mxu0 0
    %1179 = vmatprep.subr.bf16.mxu0 0
    %1180 = vmatpush1.bf16.msra.mxu0 0
    %1181 = vmatprep.subr.bf16.mxu0 0
    %1182 = vmatpush1.bf16.msra.mxu0 0
    %1183 = vmatprep.mubr.bf16.mxu0 0
    %1184 = vmatmul.mubr.bf16.gmra.mrb[0].mxu0 %v1101
    %v1185 = vpop.f32.mrb[0].mxu0
    %v1186 = vadd.f32 %v1102, %v1185
    %v1187 = vpop.f32.mrb[0].mxu0
    %v1188 = vpop.f32.mrb[0].mxu0
    %v1189 = vpop.f32.mrb[0].mxu0
    %1190 = vdwg.mxu0
    %v1191 = vmax.f32 %v1186, 0.0
    %v1192 = vld [vmem:[#allocation7 + $0x1c0] sm:$0xf]
    %v1193 = vld [vmem:[#allocation7 + $0x1c4] sm:$0xf]
    %v1194 = vld [vmem:[#allocation7 + $0x1c8] sm:$0xf]
    %v1195 = vld [vmem:[#allocation7 + $0x1cc] sm:$0xf]
    %v1196 = vld [vmem:[#allocation7 + $0x1d0] sm:$0xf]
    %v1197 = vld [vmem:[#allocation7 + $0x1d4] sm:$0xf]
    %v1198 = vld [vmem:[#allocation7 + $0x1d8] sm:$0xf]
    %v1199 = vld [vmem:[#allocation7 + $0x1dc] sm:$0xf]
    %v1200 = vld [vmem:[#allocation7 + $0x1e0] sm:$0xf]
    %v1201 = vld [vmem:[#allocation7 + $0x1e4] sm:$0xf]
    %v1202 = vld [vmem:[#allocation7 + $0x1e8] sm:$0xf]
    %v1203 = vld [vmem:[#allocation7 + $0x1ec] sm:$0xf]
    %v1204 = vld [vmem:[#allocation7 + $0x1f0] sm:$0xf]
    %v1205 = vld [vmem:[#allocation7 + $0x1f4] sm:$0xf]
    %v1206 = vld [vmem:[#allocation7 + $0x1f8] sm:$0xf]
    %v1207 = vld [vmem:[#allocation7 + $0x1fc] sm:$0xf]
    %v1208 = vpack.c.bf16 %v1084, %v1084
    %v1209 = vld [vmem:[#allocation7 + $0x200] sm:$0xf]
    %v1210 = vld [vmem:[#allocation7 + $0x204] sm:$0xf]
    %v1211 = vld [vmem:[#allocation7 + $0x208] sm:$0xf]
    %v1212 = vld [vmem:[#allocation7 + $0x20c] sm:$0xf]
    %v1213 = vld [vmem:[#allocation7 + $0x210] sm:$0xf]
    %v1214 = vld [vmem:[#allocation7 + $0x214] sm:$0xf]
    %v1215 = vld [vmem:[#allocation7 + $0x218] sm:$0xf]
    %v1216 = vld [vmem:[#allocation7 + $0x21c] sm:$0xf]
    %v1217 = vld [vmem:[#allocation7 + $0x220] sm:$0xf]
    %v1218 = vld [vmem:[#allocation7 + $0x224] sm:$0xf]
    %v1219 = vld [vmem:[#allocation7 + $0x228] sm:$0xf]
    %v1220 = vld [vmem:[#allocation7 + $0x22c] sm:$0xf]
    %v1221 = vld [vmem:[#allocation7 + $0x230] sm:$0xf]
    %v1222 = vld [vmem:[#allocation7 + $0x234] sm:$0xf]
    %v1223 = vld [vmem:[#allocation7 + $0x238] sm:$0xf]
    %v1224 = vld [vmem:[#allocation7 + $0x23c] sm:$0xf]
    %v1225 = vpack.c.bf16 %v1191, %v1191
    %v1242 = vunpack.c.l.b16 %v1209
    %v1243 = vunpack.c.l.b16 %v1210
    %v1244 = vunpack.c.l.b16 %v1211
    %v1245 = vunpack.c.l.b16 %v1212
    %v1246 = vunpack.c.l.b16 %v1213
    %v1247 = vunpack.c.l.b16 %v1214
    %v1248 = vunpack.c.l.b16 %v1215
    %v1249 = vunpack.c.l.b16 %v1216
    %v1250 = vunpack.c.l.b16 %v1217
    %v1251 = vunpack.c.l.b16 %v1218
    %v1252 = vunpack.c.l.b16 %v1219
    %v1253 = vunpack.c.l.b16 %v1220
    %v1254 = vunpack.c.l.b16 %v1221
    %v1255 = vunpack.c.l.b16 %v1222
    %v1256 = vunpack.c.l.b16 %v1223
    %v1257 = vunpack.c.l.b16 %v1224
    %v1258 = vpack.c.b16 %v1243, %v1242
    %v1259 = vpack.c.b16 %v1245, %v1244
    %v1260 = vpack.c.b16 %v1247, %v1246
    %v1261 = vpack.c.b16 %v1249, %v1248
    %v1262 = vpack.c.b16 %v1251, %v1250
    %v1263 = vpack.c.b16 %v1253, %v1252
    %v1264 = vpack.c.b16 %v1255, %v1254
    %v1265 = vpack.c.b16 %v1257, %v1256
    %1274 = vmatprep.subr.bf16.mxu0 0
    %1275 = vmatpush1.bf16.msra.mxu0 %v1258
    %1276 = vmatprep.subr.bf16.mxu0 0
    %1277 = vmatpush1.bf16.msra.mxu0 %v1259
    %1278 = vmatprep.subr.bf16.mxu0 0
    %1279 = vmatpush1.bf16.msra.mxu0 %v1260
    %1280 = vmatprep.subr.bf16.mxu0 0
    %1281 = vmatpush1.bf16.msra.mxu0 %v1261
    %1282 = vmatprep.subr.bf16.mxu0 0
    %1283 = vmatpush1.bf16.msra.mxu0 %v1262
    %1284 = vmatprep.subr.bf16.mxu0 0
    %1285 = vmatpush1.bf16.msra.mxu0 %v1263
    %1286 = vmatprep.subr.bf16.mxu0 0
    %1287 = vmatpush1.bf16.msra.mxu0 %v1264
    %1288 = vmatprep.subr.bf16.mxu0 0
    %1289 = vmatpush1.bf16.msra.mxu0 %v1265
    %1290 = vmatprep.subr.bf16.mxu0 0
    %1291 = vmatpush1.bf16.msra.mxu0 0
    %1292 = vmatprep.subr.bf16.mxu0 0
    %1293 = vmatpush1.bf16.msra.mxu0 0
    %1294 = vmatprep.subr.bf16.mxu0 0
    %1295 = vmatpush1.bf16.msra.mxu0 0
    %1296 = vmatprep.subr.bf16.mxu0 0
    %1297 = vmatpush1.bf16.msra.mxu0 0
    %1298 = vmatprep.subr.bf16.mxu0 0
    %1299 = vmatpush1.bf16.msra.mxu0 0
    %1300 = vmatprep.subr.bf16.mxu0 0
    %1301 = vmatpush1.bf16.msra.mxu0 0
    %1302 = vmatprep.subr.bf16.mxu0 0
    %1303 = vmatpush1.bf16.msra.mxu0 0
    %1304 = vmatprep.subr.bf16.mxu0 0
    %1305 = vmatpush1.bf16.msra.mxu0 0
    %1306 = vmatprep.mubr.bf16.mxu0 0
    %1307 = vmatmul.mubr.bf16.gmra.mrb[0].mxu0 %v1225
    %v1308 = vpop.f32.mrb[0].mxu0
    %v1309 = vadd.f32 0.0, %v1308
    %v1310 = vpop.f32.mrb[0].mxu0
    %v1311 = vpop.f32.mrb[0].mxu0
    %v1312 = vpop.f32.mrb[0].mxu0
    %1313 = vdwg.mxu0
    %v1330 = vunpack.c.l.b16 %v1192
    %v1331 = vunpack.c.l.b16 %v1193
    %v1332 = vunpack.c.l.b16 %v1194
    %v1333 = vunpack.c.l.b16 %v1195
    %v1334 = vunpack.c.l.b16 %v1196
    %v1335 = vunpack.c.l.b16 %v1197
    %v1336 = vunpack.c.l.b16 %v1198
    %v1337 = vunpack.c.l.b16 %v1199
    %v1338 = vunpack.c.l.b16 %v1200
    %v1339 = vunpack.c.l.b16 %v1201
    %v1340 = vunpack.c.l.b16 %v1202
    %v1341 = vunpack.c.l.b16 %v1203
    %v1342 = vunpack.c.l.b16 %v1204
    %v1343 = vunpack.c.l.b16 %v1205
    %v1344 = vunpack.c.l.b16 %v1206
    %v1345 = vunpack.c.l.b16 %v1207
    %v1346 = vpack.c.b16 %v1331, %v1330
    %v1347 = vpack.c.b16 %v1333, %v1332
    %v1348 = vpack.c.b16 %v1335, %v1334
    %v1349 = vpack.c.b16 %v1337, %v1336
    %v1350 = vpack.c.b16 %v1339, %v1338
    %v1351 = vpack.c.b16 %v1341, %v1340
    %v1352 = vpack.c.b16 %v1343, %v1342
    %v1353 = vpack.c.b16 %v1345, %v1344
    %1362 = vmatprep.subr.bf16.mxu0 0
    %1363 = vmatpush1.bf16.msra.mxu0 %v1346
    %1364 = vmatprep.subr.bf16.mxu0 0
    %1365 = vmatpush1.bf16.msra.mxu0 %v1347
    %1366 = vmatprep.subr.bf16.mxu0 0
    %1367 = vmatpush1.bf16.msra.mxu0 %v1348
    %1368 = vmatprep.subr.bf16.mxu0 0
    %1369 = vmatpush1.bf16.msra.mxu0 %v1349
    %1370 = vmatprep.subr.bf16.mxu0 0
    %1371 = vmatpush1.bf16.msra.mxu0 %v1350
    %1372 = vmatprep.subr.bf16.mxu0 0
    %1373 = vmatpush1.bf16.msra.mxu0 %v1351
    %1374 = vmatprep.subr.bf16.mxu0 0
    %1375 = vmatpush1.bf16.msra.mxu0 %v1352
    %1376 = vmatprep.subr.bf16.mxu0 0
    %1377 = vmatpush1.bf16.msra.mxu0 %v1353
    %1378 = vmatprep.subr.bf16.mxu0 0
    %1379 = vmatpush1.bf16.msra.mxu0 0
    %1380 = vmatprep.subr.bf16.mxu0 0
    %1381 = vmatpush1.bf16.msra.mxu0 0
    %1382 = vmatprep.subr.bf16.mxu0 0
    %1383 = vmatpush1.bf16.msra.mxu0 0
    %1384 = vmatprep.subr.bf16.mxu0 0
    %1385 = vmatpush1.bf16.msra.mxu0 0
    %1386 = vmatprep.subr.bf16.mxu0 0
    %1387 = vmatpush1.bf16.msra.mxu0 0
    %1388 = vmatprep.subr.bf16.mxu0 0
    %1389 = vmatpush1.bf16.msra.mxu0 0
    %1390 = vmatprep.subr.bf16.mxu0 0
    %1391 = vmatpush1.bf16.msra.mxu0 0
    %1392 = vmatprep.subr.bf16.mxu0 0
    %1393 = vmatpush1.bf16.msra.mxu0 0
    %1394 = vmatprep.mubr.bf16.mxu0 0
    %1395 = vmatmul.mubr.bf16.gmra.mrb[0].mxu0 %v1208
    %v1396 = vpop.f32.mrb[0].mxu0
    %v1397 = vadd.f32 %v1309, %v1396
    %v1398 = vpop.f32.mrb[0].mxu0
    %v1399 = vpop.f32.mrb[0].mxu0
    %v1400 = vpop.f32.mrb[0].mxu0
    %1401 = vdwg.mxu0
    %v1402 = vld [vmem:[#allocation10 + $0x4] ss:$0 sm:$0xff]
    %v1403 = vadd.f32 %v1397, %v1402
    %v1404 = vld [vmem:[#allocation7 + $0x240] sm:$0xf]
    %v1405 = vld [vmem:[#allocation7 + $0x244] sm:$0xf]
    %v1406 = vld [vmem:[#allocation7 + $0x248] sm:$0xf]
    %v1407 = vld [vmem:[#allocation7 + $0x24c] sm:$0xf]
    %v1408 = vld [vmem:[#allocation7 + $0x250] sm:$0xf]
    %v1409 = vld [vmem:[#allocation7 + $0x254] sm:$0xf]
    %v1410 = vld [vmem:[#allocation7 + $0x258] sm:$0xf]
    %v1411 = vld [vmem:[#allocation7 + $0x25c] sm:$0xf]
    %v1412 = vld [vmem:[#allocation7 + $0x260] sm:$0xf]
    %v1413 = vld [vmem:[#allocation7 + $0x264] sm:$0xf]
    %v1414 = vld [vmem:[#allocation7 + $0x268] sm:$0xf]
    %v1415 = vld [vmem:[#allocation7 + $0x26c] sm:$0xf]
    %v1416 = vld [vmem:[#allocation7 + $0x270] sm:$0xf]
    %v1417 = vld [vmem:[#allocation7 + $0x274] sm:$0xf]
    %v1418 = vld [vmem:[#allocation7 + $0x278] sm:$0xf]
    %v1419 = vld [vmem:[#allocation7 + $0x27c] sm:$0xf]
    %v1420 = vpack.c.bf16 %v1403, %v1403
    %v1421 = vld [vmem:[#allocation10 + $0xc] ss:$0 sm:$0xff]
    %v1438 = vunpack.c.l.b16 %v1404
    %v1439 = vunpack.c.l.b16 %v1405
    %v1440 = vunpack.c.l.b16 %v1406
    %v1441 = vunpack.c.l.b16 %v1407
    %v1442 = vunpack.c.l.b16 %v1408
    %v1443 = vunpack.c.l.b16 %v1409
    %v1444 = vunpack.c.l.b16 %v1410
    %v1445 = vunpack.c.l.b16 %v1411
    %v1446 = vunpack.c.l.b16 %v1412
    %v1447 = vunpack.c.l.b16 %v1413
    %v1448 = vunpack.c.l.b16 %v1414
    %v1449 = vunpack.c.l.b16 %v1415
    %v1450 = vunpack.c.l.b16 %v1416
    %v1451 = vunpack.c.l.b16 %v1417
    %v1452 = vunpack.c.l.b16 %v1418
    %v1453 = vunpack.c.l.b16 %v1419
    %v1454 = vpack.c.b16 %v1439, %v1438
    %v1455 = vpack.c.b16 %v1441, %v1440
    %v1456 = vpack.c.b16 %v1443, %v1442
    %v1457 = vpack.c.b16 %v1445, %v1444
    %v1458 = vpack.c.b16 %v1447, %v1446
    %v1459 = vpack.c.b16 %v1449, %v1448
    %v1460 = vpack.c.b16 %v1451, %v1450
    %v1461 = vpack.c.b16 %v1453, %v1452
    %1470 = vmatprep.subr.bf16.mxu0 0
    %1471 = vmatpush1.bf16.msra.mxu0 %v1454
    %1472 = vmatprep.subr.bf16.mxu0 0
    %1473 = vmatpush1.bf16.msra.mxu0 %v1455
    %1474 = vmatprep.subr.bf16.mxu0 0
    %1475 = vmatpush1.bf16.msra.mxu0 %v1456
    %1476 = vmatprep.subr.bf16.mxu0 0
    %1477 = vmatpush1.bf16.msra.mxu0 %v1457
    %1478 = vmatprep.subr.bf16.mxu0 0
    %1479 = vmatpush1.bf16.msra.mxu0 %v1458
    %1480 = vmatprep.subr.bf16.mxu0 0
    %1481 = vmatpush1.bf16.msra.mxu0 %v1459
    %1482 = vmatprep.subr.bf16.mxu0 0
    %1483 = vmatpush1.bf16.msra.mxu0 %v1460
    %1484 = vmatprep.subr.bf16.mxu0 0
    %1485 = vmatpush1.bf16.msra.mxu0 %v1461
    %1486 = vmatprep.subr.bf16.mxu0 0
    %1487 = vmatpush1.bf16.msra.mxu0 0
    %1488 = vmatprep.subr.bf16.mxu0 0
    %1489 = vmatpush1.bf16.msra.mxu0 0
    %1490 = vmatprep.subr.bf16.mxu0 0
    %1491 = vmatpush1.bf16.msra.mxu0 0
    %1492 = vmatprep.subr.bf16.mxu0 0
    %1493 = vmatpush1.bf16.msra.mxu0 0
    %1494 = vmatprep.subr.bf16.mxu0 0
    %1495 = vmatpush1.bf16.msra.mxu0 0
    %1496 = vmatprep.subr.bf16.mxu0 0
    %1497 = vmatpush1.bf16.msra.mxu0 0
    %1498 = vmatprep.subr.bf16.mxu0 0
    %1499 = vmatpush1.bf16.msra.mxu0 0
    %1500 = vmatprep.subr.bf16.mxu0 0
    %1501 = vmatpush1.bf16.msra.mxu0 0
    %1502 = vmatprep.mubr.bf16.mxu0 0
    %1503 = vmatmul.mubr.bf16.gmra.mrb[0].mxu0 %v1420
    %v1504 = vpop.f32.mrb[0].mxu0
    %v1505 = vadd.f32 %v1421, %v1504
    %v1506 = vpop.f32.mrb[0].mxu0
    %v1507 = vpop.f32.mrb[0].mxu0
    %v1508 = vpop.f32.mrb[0].mxu0
    %1509 = vdwg.mxu0
    %v1510 = vmax.f32 %v1505, 0.0
    %v1511 = vld [vmem:[#allocation7 + $0x280] sm:$0xf]
    %v1512 = vld [vmem:[#allocation7 + $0x284] sm:$0xf]
    %v1513 = vld [vmem:[#allocation7 + $0x288] sm:$0xf]
    %v1514 = vld [vmem:[#allocation7 + $0x28c] sm:$0xf]
    %v1515 = vld [vmem:[#allocation7 + $0x290] sm:$0xf]
    %v1516 = vld [vmem:[#allocation7 + $0x294] sm:$0xf]
    %v1517 = vld [vmem:[#allocation7 + $0x298] sm:$0xf]
    %v1518 = vld [vmem:[#allocation7 + $0x29c] sm:$0xf]
    %v1519 = vld [vmem:[#allocation7 + $0x2a0] sm:$0xf]
    %v1520 = vld [vmem:[#allocation7 + $0x2a4] sm:$0xf]
    %v1521 = vld [vmem:[#allocation7 + $0x2a8] sm:$0xf]
    %v1522 = vld [vmem:[#allocation7 + $0x2ac] sm:$0xf]
    %v1523 = vld [vmem:[#allocation7 + $0x2b0] sm:$0xf]
    %v1524 = vld [vmem:[#allocation7 + $0x2b4] sm:$0xf]
    %v1525 = vld [vmem:[#allocation7 + $0x2b8] sm:$0xf]
    %v1526 = vld [vmem:[#allocation7 + $0x2bc] sm:$0xf]
    %v1527 = vpack.c.bf16 %v429, %v1510
    %v1528 = vld [vmem:[#allocation10 + $0x14] ss:$0 sm:$0xff]
    %v1545 = vunpack.c.l.b16 %v1511
    %v1546 = vunpack.c.l.b16 %v1512
    %v1547 = vunpack.c.l.b16 %v1513
    %v1548 = vunpack.c.l.b16 %v1514
    %v1549 = vunpack.c.l.b16 %v1515
    %v1550 = vunpack.c.l.b16 %v1516
    %v1551 = vunpack.c.l.b16 %v1517
    %v1552 = vunpack.c.l.b16 %v1518
    %v1553 = vunpack.c.l.b16 %v1519
    %v1554 = vunpack.c.l.b16 %v1520
    %v1555 = vunpack.c.l.b16 %v1521
    %v1556 = vunpack.c.l.b16 %v1522
    %v1557 = vunpack.c.l.b16 %v1523
    %v1558 = vunpack.c.l.b16 %v1524
    %v1559 = vunpack.c.l.b16 %v1525
    %v1560 = vunpack.c.l.b16 %v1526
    %v1561 = vpack.c.b16 %v1546, %v1545
    %v1562 = vpack.c.b16 %v1548, %v1547
    %v1563 = vpack.c.b16 %v1550, %v1549
    %v1564 = vpack.c.b16 %v1552, %v1551
    %v1565 = vpack.c.b16 %v1554, %v1553
    %v1566 = vpack.c.b16 %v1556, %v1555
    %v1567 = vpack.c.b16 %v1558, %v1557
    %v1568 = vpack.c.b16 %v1560, %v1559
    %1577 = vmatprep.subr.bf16.mxu0 0
    %1578 = vmatpush1.bf16.msra.mxu0 %v1561
    %1579 = vmatprep.subr.bf16.mxu0 0
    %1580 = vmatpush1.bf16.msra.mxu0 %v1562
    %1581 = vmatprep.subr.bf16.mxu0 0
    %1582 = vmatpush1.bf16.msra.mxu0 %v1563
    %1583 = vmatprep.subr.bf16.mxu0 0
    %1584 = vmatpush1.bf16.msra.mxu0 %v1564
    %1585 = vmatprep.subr.bf16.mxu0 0
    %1586 = vmatpush1.bf16.msra.mxu0 %v1565
    %1587 = vmatprep.subr.bf16.mxu0 0
    %1588 = vmatpush1.bf16.msra.mxu0 %v1566
    %1589 = vmatprep.subr.bf16.mxu0 0
    %1590 = vmatpush1.bf16.msra.mxu0 %v1567
    %1591 = vmatprep.subr.bf16.mxu0 0
    %1592 = vmatpush1.bf16.msra.mxu0 %v1568
    %1593 = vmatprep.subr.bf16.mxu0 0
    %1594 = vmatpush1.bf16.msra.mxu0 0
    %1595 = vmatprep.subr.bf16.mxu0 0
    %1596 = vmatpush1.bf16.msra.mxu0 0
    %1597 = vmatprep.subr.bf16.mxu0 0
    %1598 = vmatpush1.bf16.msra.mxu0 0
    %1599 = vmatprep.subr.bf16.mxu0 0
    %1600 = vmatpush1.bf16.msra.mxu0 0
    %1601 = vmatprep.subr.bf16.mxu0 0
    %1602 = vmatpush1.bf16.msra.mxu0 0
    %1603 = vmatprep.subr.bf16.mxu0 0
    %1604 = vmatpush1.bf16.msra.mxu0 0
    %1605 = vmatprep.subr.bf16.mxu0 0
    %1606 = vmatpush1.bf16.msra.mxu0 0
    %1607 = vmatprep.subr.bf16.mxu0 0
    %1608 = vmatpush1.bf16.msra.mxu0 0
    %1609 = vmatprep.mubr.bf16.mxu0 0
    %1610 = vmatmul.mubr.bf16.gmra.mrb[0].mxu0 %v1527
    %v1611 = vpop.f32.mrb[0].mxu0
    %v1612 = vadd.f32 %v1528, %v1611
    %v1613 = vpop.f32.mrb[0].mxu0
    %v1614 = vpop.f32.mrb[0].mxu0
    %v1615 = vadd.f32 %v1528, %v1614
    %v1616 = vpop.f32.mrb[0].mxu0
    %1617 = vmatprep.mubr.bf16.mxu0 0
    %1618 = vmatmul.mubr.bf16.gmra.mrb[0].mxu0 %v692
    %v1619 = vpop.f32.mrb[0].mxu0
    %v1620 = vadd.f32 %v1528, %v1619
    %v1621 = vpop.f32.mrb[0].mxu0
    %v1622 = vpop.f32.mrb[0].mxu0
    %v1623 = vpop.f32.mrb[0].mxu0
    %1624 = vdwg.mxu0
    %v1625 = vmax.f32 %v1612, 0.0
    %v1626 = vmax.f32 %v1615, 0.0
    %v1627 = vmax.f32 %v1620, 0.0
    %v1628 = vld [vmem:[#allocation10 + $0x1c] ss:$0 sm:$0xff]
    %v1629 = vmul.f32 %v1625, %v1628
    %v1630 = vmul.f32 %v1626, %v1628
    %v1631 = vmul.f32 %v1627, %v1628
    %1632 = vadd.xlane.f32.xlu0 %v1629
    %v1633 = vpop.xlane.xlu0 %1632
    %1634 = vadd.xlane.f32.xlu0 %v1630
    %v1635 = vpop.xlane.xlu0 %1634
    %1636 = vadd.xlane.f32.xlu0 %v1631
    %v1637 = vpop.xlane.xlu0 %1636
    %1638 = vst [vmem:[#allocation11] sm:$0xff] %v1510
    %1639 = vst [vmem:[#allocation11 + $0x10] sm:$0xff] %v429
    %1640 = vst [vmem:[#allocation11 + $0x20] sm:$0xff] %v537
    %1641 = vst [vmem:[#allocation11 + $0x8] sm:$0xff] %v1633
    %1642 = vst [vmem:[#allocation11 + $0x18] sm:$0xff] %v1635
    %1643 = vst [vmem:[#allocation11 + $0x28] sm:$0xff] %v1637
    // Predicated region
    $region42: #{tpu_custom_call.1} parent=1 // pred_check
      _
    $region43: #{tpu_custom_call.1} parent=1 // pred_check_branch
      %1645 = sbr.rel (0) target = $region45
    $region44: #{tpu_custom_call.1} parent=1 // pred_region
      %s1647 = ssub.s32 768, 768
      %1648 = vsyncadd [#allocation4], %s1647
      %s1649 = sshll.u32 [#allocation11], 4
      %s1650 = int_to_ptr.vmem [resolvable:$true] %s1649
      %1655 = dma.vmem_to_hbm [thread:$0]  %s1650, 768, %s5, [#allocation4], 256, 256, 16
    $region45: #{tpu_custom_call.1} parent=1 // pred_fallthru
      _
    // Predicated region
    $region46: #{tpu_custom_call.1} parent=1 // pred_check
      _
    $region47: #{tpu_custom_call.1} parent=1 // pred_check_branch
      %1657 = sbr.rel (0) target = $region49
    $region48: #{tpu_custom_call.1} parent=1 // pred_region
      %1658 = dma.done [#allocation4], 768
    $region49: #{tpu_custom_call.1} parent=1 // pred_fallthru
      _
    %1659 = vsyncpa [#allocation3], 1
    %1660 = vsyncpa [#allocation6], 1
    %1661 = vsyncpa [#allocation9], 1
    %1662 = vsyncpa [#allocation4], 1

</llo_original>
